<compile_context>
chip_gen: v7x
topology: tpu7x:2x2x1
jax: 0.10.0
libtpu: 0.0.40
codegen_flags: <defaults>
</compile_context>

<pallas_src>
import numpy as np
import jax
import jax.numpy as jnp
from jax import lax
from jax.experimental import pallas as pl
from jax.experimental.pallas import tpu as pltpu

D      = 32     # d_model
DFF    = 128    # feed-forward hidden dim (lane-dense)
VOCAB  = 128    # vocabulary size (lane-dense logits)
T_ENC  = 8      # encoder (prompt) sequence length
T_DEC  = 8      # max decoder positions (>= max_length + 1)


def _rmsnorm(h):
    var = jnp.mean(h * h, axis=-1, keepdims=True)
    return h * lax.rsqrt(var + 1e-6)


def _dot_nt(a, b):
    """a @ b.T on the MXU without materializing a transpose."""
    return lax.dot_general(a, b, (((1,), (1,)), ((), ())),
                           preferred_element_type=jnp.float32)


# ----------------------------------------------------------------------------
# Prompt-prep kernel: cross-attention K/V of the encoder outputs, once/prompt.
# ----------------------------------------------------------------------------
def cross_kv_kernel(e_ref, ck_ref, cv_ref, ke_ref, ve_ref):
    e = e_ref[...].astype(jnp.bfloat16)
    ke_ref[...] = jnp.dot(e, ck_ref[...], preferred_element_type=jnp.float32)
    ve_ref[...] = jnp.dot(e, cv_ref[...], preferred_element_type=jnp.float32)


def cross_kv(enc_out, ck, cv):
    return pl.pallas_call(
        cross_kv_kernel,
        out_shape=(jax.ShapeDtypeStruct((T_ENC, D), jnp.float32),
                   jax.ShapeDtypeStruct((T_ENC, D), jnp.float32)),
        in_specs=[pl.BlockSpec(memory_space=pltpu.MemorySpace.VMEM)] * 3,
        out_specs=(pl.BlockSpec(memory_space=pltpu.MemorySpace.VMEM),) * 2,
    )(enc_out, ck, cv)


# ----------------------------------------------------------------------------
# Per-token decoder step: embed new token, KV-cached self-attn, cross-attn
# over precomputed encoder K/V, ReLU FFN, final norm + LM head -> (1, VOCAB).
# ----------------------------------------------------------------------------
def t5_decode_step_kernel(scalars_ref,                    # SMEM (2,): [pos, tok]
                          emb_ref,                        # (VOCAB, D) f32
                          ke_ref, ve_ref,                 # (T_ENC, D) f32
                          wqkv_ref,                       # (D, 4D) bf16 [wq|wk|wv|0]
                          wo_ref, cq_ref, co_ref,         # (D, D)  bf16
                          w1_ref, w2_ref,                 # (D,DFF),(DFF,D) bf16
                          wlm_ref,                        # (D, VOCAB) bf16
                          kc_in_ref, vc_in_ref,           # (T_DEC, D) f32
                          logits_ref,                     # out (1, VOCAB) f32
                          kc_out_ref, vc_out_ref):        # out (T_DEC, D) f32
    pos = scalars_ref[0]
    tok = scalars_ref[1]
    scale = jnp.float32(1.0 / np.sqrt(D))

    # On-device embedding gather of the single new token.
    x = emb_ref[pl.ds(tok, 1), :]                         # (1, D) f32

    # --- causal self-attention, incremental with KV cache -------------------
    hn = _rmsnorm(x)
    qkv = jnp.dot(hn.astype(jnp.bfloat16), wqkv_ref[...],
                  preferred_element_type=jnp.float32)     # (1, 128) lane-dense
    q     = qkv[:, 0:D]
    k_new = qkv[:, D:2 * D]
    v_new = qkv[:, 2 * D:3 * D]

    # Write the new K/V row at `pos` (select-based update; caches aliased
    # in/out at the HBM level via input_output_aliases).
    row = lax.broadcasted_iota(jnp.int32, (T_DEC, D), 0)
    kc = jnp.where(row == pos, jnp.broadcast_to(k_new, (T_DEC, D)), kc_in_ref[...])
    vc = jnp.where(row == pos, jnp.broadcast_to(v_new, (T_DEC, D)), vc_in_ref[...])
    kc_out_ref[...] = kc
    vc_out_ref[...] = vc

    s = _dot_nt(q, kc) * scale                            # (1, T_DEC)
    col = lax.broadcasted_iota(jnp.int32, (1, T_DEC), 1)
    s = jnp.where(col <= pos, s, jnp.float32(-1e9))       # never attend padding
    p = jax.nn.softmax(s, axis=-1)
    attn = jnp.dot(p, vc, preferred_element_type=jnp.float32)
    x = x + jnp.dot(attn.astype(jnp.bfloat16), wo_ref[...],
                    preferred_element_type=jnp.float32)

    # --- cross-attention (encoder K/V precomputed once per prompt) ----------
    hn = _rmsnorm(x)
    qc = jnp.dot(hn.astype(jnp.bfloat16), cq_ref[...],
                 preferred_element_type=jnp.float32)
    s = _dot_nt(qc, ke_ref[...]) * scale                  # (1, T_ENC)
    p = jax.nn.softmax(s, axis=-1)
    attn = jnp.dot(p, ve_ref[...], preferred_element_type=jnp.float32)
    x = x + jnp.dot(attn.astype(jnp.bfloat16), co_ref[...],
                    preferred_element_type=jnp.float32)

    # --- feed-forward (lane-dense hidden) ------------------------------------
    hn = _rmsnorm(x)
    h = jnp.maximum(jnp.dot(hn.astype(jnp.bfloat16), w1_ref[...],
                            preferred_element_type=jnp.float32), 0.0)
    x = x + jnp.dot(h.astype(jnp.bfloat16), w2_ref[...],
                    preferred_element_type=jnp.float32)

    # --- final norm + LM head: logits for the active position only ----------
    hn = _rmsnorm(x)
    logits_ref[...] = jnp.dot(hn.astype(jnp.bfloat16), wlm_ref[...],
                              preferred_element_type=jnp.float32)


def decoder_step(scalars, emb, ke, ve, wqkv, wo, cq, co, w1, w2, wlm, kc, vc):
    return pl.pallas_call(
        t5_decode_step_kernel,
        out_shape=(jax.ShapeDtypeStruct((1, VOCAB), jnp.float32),
                   jax.ShapeDtypeStruct((T_DEC, D), jnp.float32),
                   jax.ShapeDtypeStruct((T_DEC, D), jnp.float32)),
        in_specs=[pl.BlockSpec(memory_space=pltpu.MemorySpace.SMEM)]
                 + [pl.BlockSpec(memory_space=pltpu.MemorySpace.VMEM)] * 12,
        out_specs=(pl.BlockSpec(memory_space=pltpu.MemorySpace.VMEM),) * 3,
        input_output_aliases={11: 1, 12: 2},   # kc, vc updated in place
    )(scalars, emb, ke, ve, wqkv, wo, cq, co, w1, w2, wlm, kc, vc)


# ----------------------------------------------------------------------------
# Fully on-device generation loop (mirrors GenerativeT5_custom_encoder.forward)
# ----------------------------------------------------------------------------
def make_generate_fn(max_length, temperature=1.0, repetition_penalty=1.0,
                     top_k=50, top_p=0.0):
    assert max_length <= T_DEC - 1, "increase T_DEC for longer generations"
    temp_div = float(temperature) if temperature > 0 else 1.0
    rep_pen = float(repetition_penalty)

    def filter_logits(logits, filter_value=-1e9):
        """top-k / top-p filtering on a (VOCAB,) logits vector (traced)."""
        if top_k > 0:
            k = min(int(top_k), VOCAB)
            kth = lax.top_k(logits, k)[0][-1]
            logits = jnp.where(logits < kth, filter_value, logits)
        if top_p > 0.0:
            sorted_logits = jnp.sort(logits)[::-1]
            cum = jnp.cumsum(jax.nn.softmax(sorted_logits))
            keep = cum <= top_p
            keep = keep.at[0].set(True)                  # always keep the best
            cutoff = jnp.min(jnp.where(keep, sorted_logits, jnp.inf))
            logits = jnp.where(logits >= cutoff, logits, filter_value)
        return logits

    @jax.jit
    def generate(params, embedding, enc_out, rng):
        wqkv, wo, cq, ck, cv, co, w1, w2, wlm = params
        ke, ve = cross_kv(enc_out, ck, cv)               # once per prompt

        def cond(state):
            i, gen, length, kc, vc, lbuf, key, finished = state
            return (i < max_length) & (~finished) & (length < T_DEC)

        def body(state):
            i, gen, length, kc, vc, lbuf, key, finished = state
            pos = length - 1
            tok = gen[pos]
            scalars = jnp.stack([pos, tok]).astype(jnp.int32)
            logits_row, kc, vc = decoder_step(
                scalars, embedding, ke, ve, wqkv, wo, cq, co, w1, w2, wlm, kc, vc)
            ntl = logits_row[0] / jnp.float32(temp_div)
            is_eos = jnp.argmax(ntl) == 1                # EOS check pre-penalty

            # Repetition penalty: divide logits of every already-generated
            # token once (set semantics), exactly like the reference.
            valid = jnp.arange(T_DEC) < length
            gen_valid = jnp.where(valid, gen, -1)
            present = jnp.any(gen_valid[:, None] == jnp.arange(VOCAB)[None, :],
                              axis=0)
            ntl = jnp.where(present, ntl / jnp.float32(rep_pen), ntl)

            if temperature == 0:
                next_token = jnp.argmax(ntl).astype(jnp.int32)
                key_next = key
            else:
                key_next, sub = jax.random.split(key)
                next_token = jax.random.categorical(
                    sub, filter_logits(ntl)).astype(jnp.int32)

            commit = ~is_eos
            gen_new = lax.dynamic_update_index_in_dim(gen, next_token, length, 0)
            lbuf_new = lax.dynamic_update_slice(lbuf, ntl[None, :],
                                                (pos, jnp.int32(0)))
            gen = jnp.where(commit, gen_new, gen)
            lbuf = jnp.where(commit, lbuf_new, lbuf)
            length = jnp.where(commit, length + jnp.int32(1), length)
            return (i + jnp.int32(1), gen, length, kc, vc, lbuf, key_next, is_eos)

        state0 = (jnp.int32(0),
                  jnp.zeros((T_DEC,), jnp.int32),        # generated (leading 0)
                  jnp.int32(1),                          # current length
                  jnp.zeros((T_DEC, D), jnp.float32),    # K cache
                  jnp.zeros((T_DEC, D), jnp.float32),    # V cache
                  jnp.zeros((max_length, VOCAB), jnp.float32),
                  rng,
                  jnp.bool_(False))
        _, gen, length, _, _, lbuf, _, _ = lax.while_loop(cond, body, state0)
        return gen, length, lbuf

    return generate


# ----------------------------------------------------------------------------
# Deterministic parameter construction.
# ----------------------------------------------------------------------------
def make_params(key):
    def w(k, shape, scale=0.3, dtype=jnp.bfloat16):
        return (jax.random.normal(k, shape, dtype=jnp.float32) * scale).astype(dtype)

    keys = jax.random.split(key, 14)
    wq, wk, wv, wo = (w(keys[i], (D, D)) for i in range(4))
    cq, ck, cv, co = (w(keys[4 + i], (D, D)) for i in range(4))
    w1 = w(keys[8], (D, DFF))
    w2 = w(keys[9], (DFF, D))
    wlm = w(keys[10], (D, VOCAB))
    # Lane-dense fused QKV weight: [wq | wk | wv | 0] -> (D, 128).
    wqkv = jnp.concatenate([wq, wk, wv, jnp.zeros((D, D), jnp.bfloat16)], axis=1)
    embedding = w(keys[11], (VOCAB, D), scale=1.0, dtype=jnp.float32)
    enc_out = w(keys[12], (T_ENC, D), scale=1.0, dtype=jnp.float32)
    params = (wqkv, wo, cq, ck, cv, co, w1, w2, wlm)
    return params, embedding, enc_out


if __name__ == "__main__":
    params, embedding, encoder_outputs_prompt = make_params(jax.random.PRNGKey(0))

    generate = make_generate_fn(max_length=6, temperature=1.0,
                                repetition_penalty=1.2, top_k=50, top_p=0.0)
    gen, length, logits_buf = generate(params, embedding,
                                       encoder_outputs_prompt,
                                       jax.random.PRNGKey(42))
    jax.block_until_ready((gen, length, logits_buf))

    n = int(length) - 1
    new_tokens = [int(t) for t in np.asarray(gen)[1:1 + n]]
    new_logits = [np.asarray(logits_buf)[i] for i in range(n)]
    # TODO(synk): tokenizer.decode(new_tokens) has no Pallas/JAX equivalent;
    # raw token ids are returned instead.
    print("KERNEL_OK")
</pallas_src>

<mosaic_0001>
module attributes {stable_mosaic.version = 11 : i64} {
  func.func @cross_kv_kernel(%arg0: memref<8x32xf32, #tpu.memory_space<vmem>>, %arg1: memref<32x32xbf16, #tpu.memory_space<vmem>>, %arg2: memref<32x32xbf16, #tpu.memory_space<vmem>>, %arg3: memref<8x32xf32, #tpu.memory_space<vmem>>, %arg4: memref<8x32xf32, #tpu.memory_space<vmem>>) attributes {dimension_semantics = [], scalar_prefetch = 0 : i64, scratch_operands = 0 : i64, tpu.core_type = #tpu.core_type<tc>} {
    %c0 = arith.constant 0 : index
    %c0_0 = arith.constant 0 : index
    %0 = vector.load %arg0[%c0, %c0_0] : memref<8x32xf32, #tpu.memory_space<vmem>>, vector<8x32xf32>
    %1 = arith.truncf %0 : vector<8x32xf32> to vector<8x32xbf16>
    %c0_1 = arith.constant 0 : index
    %c0_2 = arith.constant 0 : index
    %2 = vector.load %arg1[%c0_1, %c0_2] : memref<32x32xbf16, #tpu.memory_space<vmem>>, vector<32x32xbf16>
    %cst = arith.constant dense<0.000000e+00> : vector<8x32xf32>
    %3 = tpu.matmul %1, %2, %cst {dimension_numbers = #tpu.dot_dimension_numbers<[1], [0], [0], [1], [0, 0, 1, 1], [], []>} : vector<8x32xbf16>, vector<32x32xbf16>, vector<8x32xf32> -> vector<8x32xf32>
    %c0_3 = arith.constant 0 : index
    %c0_4 = arith.constant 0 : index
    %4 = vector.load %arg3[%c0_3, %c0_4] : memref<8x32xf32, #tpu.memory_space<vmem>>, vector<8x32xf32>
    tpu.vector_store %arg3[%c0_3, %c0_4], %3 {strides = array<i32>} : memref<8x32xf32, #tpu.memory_space<vmem>>, vector<8x32xf32>,
    %c0_5 = arith.constant 0 : index
    %c0_6 = arith.constant 0 : index
    %5 = vector.load %arg2[%c0_5, %c0_6] : memref<32x32xbf16, #tpu.memory_space<vmem>>, vector<32x32xbf16>
    %cst_7 = arith.constant dense<0.000000e+00> : vector<8x32xf32>
    %6 = tpu.matmul %1, %5, %cst_7 {dimension_numbers = #tpu.dot_dimension_numbers<[1], [0], [0], [1], [0, 0, 1, 1], [], []>} : vector<8x32xbf16>, vector<32x32xbf16>, vector<8x32xf32> -> vector<8x32xf32>
    %c0_8 = arith.constant 0 : index
    %c0_9 = arith.constant 0 : index
    %7 = vector.load %arg4[%c0_8, %c0_9] : memref<8x32xf32, #tpu.memory_space<vmem>>, vector<8x32xf32>
    tpu.vector_store %arg4[%c0_8, %c0_9], %6 {strides = array<i32>} : memref<8x32xf32, #tpu.memory_space<vmem>>, vector<8x32xf32>,
    return
  }
}

module attributes {stable_mosaic.version = 11 : i64} {
  func.func @t5_decode_step_kernel(%arg0: memref<2xi32, #tpu.memory_space<smem>>, %arg1: memref<128x32xf32, #tpu.memory_space<vmem>>, %arg2: memref<8x32xf32, #tpu.memory_space<vmem>>, %arg3: memref<8x32xf32, #tpu.memory_space<vmem>>, %arg4: memref<32x128xbf16, #tpu.memory_space<vmem>>, %arg5: memref<32x32xbf16, #tpu.memory_space<vmem>>, %arg6: memref<32x32xbf16, #tpu.memory_space<vmem>>, %arg7: memref<32x32xbf16, #tpu.memory_space<vmem>>, %arg8: memref<32x128xbf16, #tpu.memory_space<vmem>>, %arg9: memref<128x32xbf16, #tpu.memory_space<vmem>>, %arg10: memref<32x128xbf16, #tpu.memory_space<vmem>>, %arg11: memref<8x32xf32, #tpu.memory_space<vmem>>, %arg12: memref<8x32xf32, #tpu.memory_space<vmem>>, %arg13: memref<1x128xf32, #tpu.memory_space<vmem>>, %arg14: memref<8x32xf32, #tpu.memory_space<vmem>>, %arg15: memref<8x32xf32, #tpu.memory_space<vmem>>) attributes {dimension_semantics = [], scalar_prefetch = 0 : i64, scratch_operands = 0 : i64, tpu.core_type = #tpu.core_type<tc>} {
    %c0 = arith.constant 0 : index
    %0 = memref.load %arg0[%c0] : memref<2xi32, #tpu.memory_space<smem>>
    %c1 = arith.constant 1 : index
    %1 = memref.load %arg0[%c1] : memref<2xi32, #tpu.memory_space<smem>>
    %2 = arith.index_cast %1 : i32 to index
    %c0_0 = arith.constant 0 : index
    %3 = vector.load %arg1[%2, %c0_0] : memref<128x32xf32, #tpu.memory_space<vmem>>, vector<1x32xf32>
    %4 = arith.mulf %3, %3 : vector<1x32xf32>
    %cst = arith.constant dense<0.000000e+00> : vector<1xf32>
    %5 = vector.multi_reduction <add>, %4, %cst [1] : vector<1x32xf32> to vector<1xf32>
    %6 = vector.shape_cast %5 : vector<1xf32> to vector<1x1xf32>
    %cst_1 = arith.constant 3.200000e+01 : f32
    %7 = vector.broadcast %cst_1 : f32 to vector<1x1xf32>
    %8 = arith.divf %6, %7 : vector<1x1xf32>
    %cst_2 = arith.constant 9.99999997E-7 : f32
    %9 = vector.broadcast %cst_2 : f32 to vector<1x1xf32>
    %10 = arith.addf %8, %9 : vector<1x1xf32>
    %11 = math.rsqrt %10 : vector<1x1xf32>
    %12 = vector.broadcast %11 : vector<1x1xf32> to vector<1x32xf32>
    %13 = arith.mulf %3, %12 : vector<1x32xf32>
    %14 = arith.truncf %13 : vector<1x32xf32> to vector<1x32xbf16>
    %c0_3 = arith.constant 0 : index
    %c0_4 = arith.constant 0 : index
    %15 = vector.load %arg4[%c0_3, %c0_4] : memref<32x128xbf16, #tpu.memory_space<vmem>>, vector<32x128xbf16>
    %cst_5 = arith.constant dense<0.000000e+00> : vector<1x128xf32>
    %16 = tpu.matmul %14, %15, %cst_5 {dimension_numbers = #tpu.dot_dimension_numbers<[1], [0], [0], [1], [0, 0, 1, 1], [], []>} : vector<1x32xbf16>, vector<32x128xbf16>, vector<1x128xf32> -> vector<1x128xf32>
    %17 = vector.extract_strided_slice %16 {offsets = [0, 0], sizes = [1, 32], strides = [1, 1]} : vector<1x128xf32> to vector<1x32xf32>
    %18 = vector.extract_strided_slice %16 {offsets = [0, 32], sizes = [1, 32], strides = [1, 1]} : vector<1x128xf32> to vector<1x32xf32>
    %19 = vector.extract_strided_slice %16 {offsets = [0, 64], sizes = [1, 32], strides = [1, 1]} : vector<1x128xf32> to vector<1x32xf32>
    %20 = tpu.iota {dimensions = array<i32: 0>} : vector<8x32xi32>
    %21 = vector.broadcast %0 : i32 to vector<8x32xi32>
    %22 = arith.cmpi eq, %20, %21 : vector<8x32xi32>
    %23 = vector.shape_cast %18 : vector<1x32xf32> to vector<1x32xf32>
    %24 = vector.broadcast %23 : vector<1x32xf32> to vector<8x32xf32>
    %c0_6 = arith.constant 0 : index
    %c0_7 = arith.constant 0 : index
    %25 = vector.load %arg11[%c0_6, %c0_7] : memref<8x32xf32, #tpu.memory_space<vmem>>, vector<8x32xf32>
    %26 = arith.select %22, %24, %25 : vector<8x32xi1>, vector<8x32xf32>
    %27 = vector.broadcast %0 : i32 to vector<8x32xi32>
    %28 = arith.cmpi eq, %20, %27 : vector<8x32xi32>
    %29 = vector.shape_cast %19 : vector<1x32xf32> to vector<1x32xf32>
    %30 = vector.broadcast %29 : vector<1x32xf32> to vector<8x32xf32>
    %c0_8 = arith.constant 0 : index
    %c0_9 = arith.constant 0 : index
    %31 = vector.load %arg12[%c0_8, %c0_9] : memref<8x32xf32, #tpu.memory_space<vmem>>, vector<8x32xf32>
    %32 = arith.select %28, %30, %31 : vector<8x32xi1>, vector<8x32xf32>
    %c0_10 = arith.constant 0 : index
    %c0_11 = arith.constant 0 : index
    %33 = vector.load %arg14[%c0_10, %c0_11] : memref<8x32xf32, #tpu.memory_space<vmem>>, vector<8x32xf32>
    tpu.vector_store %arg14[%c0_10, %c0_11], %26 {strides = array<i32>} : memref<8x32xf32, #tpu.memory_space<vmem>>, vector<8x32xf32>,
    %c0_12 = arith.constant 0 : index
    %c0_13 = arith.constant 0 : index
    %34 = vector.load %arg15[%c0_12, %c0_13] : memref<8x32xf32, #tpu.memory_space<vmem>>, vector<8x32xf32>
    tpu.vector_store %arg15[%c0_12, %c0_13], %32 {strides = array<i32>} : memref<8x32xf32, #tpu.memory_space<vmem>>, vector<8x32xf32>,
    %cst_14 = arith.constant dense<0.000000e+00> : vector<1x8xf32>
    %35 = tpu.matmul %17, %26, %cst_14 {dimension_numbers = #tpu.dot_dimension_numbers<[1], [1], [0], [0], [0, 0, 1, 0], [], []>} : vector<1x32xf32>, vector<8x32xf32>, vector<1x8xf32> -> vector<1x8xf32>
    %cst_15 = arith.constant 0.176776692 : f32
    %36 = vector.broadcast %cst_15 : f32 to vector<1x8xf32>
    %37 = arith.mulf %35, %36 : vector<1x8xf32>
    %38 = tpu.iota {dimensions = array<i32: 1>} : vector<1x8xi32>
    %39 = vector.broadcast %0 : i32 to vector<1x8xi32>
    %40 = arith.cmpi sle, %38, %39 : vector<1x8xi32>
    %cst_16 = arith.constant -1.000000e+09 : f32
    %41 = vector.broadcast %cst_16 : f32 to vector<1x8xf32>
    %42 = arith.select %40, %37, %41 : vector<1x8xi1>, vector<1x8xf32>
    %cst_17 = arith.constant dense<0xFF800000> : vector<1xf32>
    %43 = vector.multi_reduction <maximumf>, %42, %cst_17 [1] : vector<1x8xf32> to vector<1xf32>
    %cst_18 = arith.constant 0xFF800000 : f32
    %44 = vector.broadcast %cst_18 : f32 to vector<1xf32>
    %45 = arith.maximumf %44, %43 : vector<1xf32>
    %46 = vector.shape_cast %45 : vector<1xf32> to vector<1x1xf32>
    %47 = vector.broadcast %46 : vector<1x1xf32> to vector<1x8xf32>
    %48 = arith.subf %42, %47 : vector<1x8xf32>
    %49 = math.exp %48 : vector<1x8xf32>
    %cst_19 = arith.constant dense<0.000000e+00> : vector<1xf32>
    %50 = vector.multi_reduction <add>, %49, %cst_19 [1] : vector<1x8xf32> to vector<1xf32>
    %51 = vector.shape_cast %50 : vector<1xf32> to vector<1x1xf32>
    %52 = vector.broadcast %51 : vector<1x1xf32> to vector<1x8xf32>
    %53 = arith.divf %49, %52 : vector<1x8xf32>
    %cst_20 = arith.constant dense<0.000000e+00> : vector<1x32xf32>
    %54 = tpu.matmul %53, %32, %cst_20 {dimension_numbers = #tpu.dot_dimension_numbers<[1], [0], [0], [1], [0, 0, 1, 1], [], []>} : vector<1x8xf32>, vector<8x32xf32>, vector<1x32xf32> -> vector<1x32xf32>
    %55 = arith.truncf %54 : vector<1x32xf32> to vector<1x32xbf16>
    %c0_21 = arith.constant 0 : index
    %c0_22 = arith.constant 0 : index
    %56 = vector.load %arg5[%c0_21, %c0_22] : memref<32x32xbf16, #tpu.memory_space<vmem>>, vector<32x32xbf16>
    %cst_23 = arith.constant dense<0.000000e+00> : vector<1x32xf32>
    %57 = tpu.matmul %55, %56, %cst_23 {dimension_numbers = #tpu.dot_dimension_numbers<[1], [0], [0], [1], [0, 0, 1, 1], [], []>} : vector<1x32xbf16>, vector<32x32xbf16>, vector<1x32xf32> -> vector<1x32xf32>
    %58 = arith.addf %3, %57 : vector<1x32xf32>
    %59 = arith.mulf %58, %58 : vector<1x32xf32>
    %cst_24 = arith.constant dense<0.000000e+00> : vector<1xf32>
    %60 = vector.multi_reduction <add>, %59, %cst_24 [1] : vector<1x32xf32> to vector<1xf32>
    %61 = vector.shape_cast %60 : vector<1xf32> to vector<1x1xf32>
    %cst_25 = arith.constant 3.200000e+01 : f32
    %62 = vector.broadcast %cst_25 : f32 to vector<1x1xf32>
    %63 = arith.divf %61, %62 : vector<1x1xf32>
    %cst_26 = arith.constant 9.99999997E-7 : f32
    %64 = vector.broadcast %cst_26 : f32 to vector<1x1xf32>
    %65 = arith.addf %63, %64 : vector<1x1xf32>
    %66 = math.rsqrt %65 : vector<1x1xf32>
    %67 = vector.broadcast %66 : vector<1x1xf32> to vector<1x32xf32>
    %68 = arith.mulf %58, %67 : vector<1x32xf32>
    %69 = arith.truncf %68 : vector<1x32xf32> to vector<1x32xbf16>
    %c0_27 = arith.constant 0 : index
    %c0_28 = arith.constant 0 : index
    %70 = vector.load %arg6[%c0_27, %c0_28] : memref<32x32xbf16, #tpu.memory_space<vmem>>, vector<32x32xbf16>
    %cst_29 = arith.constant dense<0.000000e+00> : vector<1x32xf32>
    %71 = tpu.matmul %69, %70, %cst_29 {dimension_numbers = #tpu.dot_dimension_numbers<[1], [0], [0], [1], [0, 0, 1, 1], [], []>} : vector<1x32xbf16>, vector<32x32xbf16>, vector<1x32xf32> -> vector<1x32xf32>
    %c0_30 = arith.constant 0 : index
    %c0_31 = arith.constant 0 : index
    %72 = vector.load %arg2[%c0_30, %c0_31] : memref<8x32xf32, #tpu.memory_space<vmem>>, vector<8x32xf32>
    %cst_32 = arith.constant dense<0.000000e+00> : vector<1x8xf32>
    %73 = tpu.matmul %71, %72, %cst_32 {dimension_numbers = #tpu.dot_dimension_numbers<[1], [1], [0], [0], [0, 0, 1, 0], [], []>} : vector<1x32xf32>, vector<8x32xf32>, vector<1x8xf32> -> vector<1x8xf32>
    %cst_33 = arith.constant 0.176776692 : f32
    %74 = vector.broadcast %cst_33 : f32 to vector<1x8xf32>
    %75 = arith.mulf %73, %74 : vector<1x8xf32>
    %cst_34 = arith.constant dense<0xFF800000> : vector<1xf32>
    %76 = vector.multi_reduction <maximumf>, %75, %cst_34 [1] : vector<1x8xf32> to vector<1xf32>
    %cst_35 = arith.constant 0xFF800000 : f32
    %77 = vector.broadcast %cst_35 : f32 to vector<1xf32>
    %78 = arith.maximumf %77, %76 : vector<1xf32>
    %79 = vector.shape_cast %78 : vector<1xf32> to vector<1x1xf32>
    %80 = vector.broadcast %79 : vector<1x1xf32> to vector<1x8xf32>
    %81 = arith.subf %75, %80 : vector<1x8xf32>
    %82 = math.exp %81 : vector<1x8xf32>
    %cst_36 = arith.constant dense<0.000000e+00> : vector<1xf32>
    %83 = vector.multi_reduction <add>, %82, %cst_36 [1] : vector<1x8xf32> to vector<1xf32>
    %84 = vector.shape_cast %83 : vector<1xf32> to vector<1x1xf32>
    %85 = vector.broadcast %84 : vector<1x1xf32> to vector<1x8xf32>
    %86 = arith.divf %82, %85 : vector<1x8xf32>
    %c0_37 = arith.constant 0 : index
    %c0_38 = arith.constant 0 : index
    %87 = vector.load %arg3[%c0_37, %c0_38] : memref<8x32xf32, #tpu.memory_space<vmem>>, vector<8x32xf32>
    %cst_39 = arith.constant dense<0.000000e+00> : vector<1x32xf32>
    %88 = tpu.matmul %86, %87, %cst_39 {dimension_numbers = #tpu.dot_dimension_numbers<[1], [0], [0], [1], [0, 0, 1, 1], [], []>} : vector<1x8xf32>, vector<8x32xf32>, vector<1x32xf32> -> vector<1x32xf32>
    %89 = arith.truncf %88 : vector<1x32xf32> to vector<1x32xbf16>
    %c0_40 = arith.constant 0 : index
    %c0_41 = arith.constant 0 : index
    %90 = vector.load %arg7[%c0_40, %c0_41] : memref<32x32xbf16, #tpu.memory_space<vmem>>, vector<32x32xbf16>
    %cst_42 = arith.constant dense<0.000000e+00> : vector<1x32xf32>
    %91 = tpu.matmul %89, %90, %cst_42 {dimension_numbers = #tpu.dot_dimension_numbers<[1], [0], [0], [1], [0, 0, 1, 1], [], []>} : vector<1x32xbf16>, vector<32x32xbf16>, vector<1x32xf32> -> vector<1x32xf32>
    %92 = arith.addf %58, %91 : vector<1x32xf32>
    %93 = arith.mulf %92, %92 : vector<1x32xf32>
    %cst_43 = arith.constant dense<0.000000e+00> : vector<1xf32>
    %94 = vector.multi_reduction <add>, %93, %cst_43 [1] : vector<1x32xf32> to vector<1xf32>
    %95 = vector.shape_cast %94 : vector<1xf32> to vector<1x1xf32>
    %cst_44 = arith.constant 3.200000e+01 : f32
    %96 = vector.broadcast %cst_44 : f32 to vector<1x1xf32>
    %97 = arith.divf %95, %96 : vector<1x1xf32>
    %cst_45 = arith.constant 9.99999997E-7 : f32
    %98 = vector.broadcast %cst_45 : f32 to vector<1x1xf32>
    %99 = arith.addf %97, %98 : vector<1x1xf32>
    %100 = math.rsqrt %99 : vector<1x1xf32>
    %101 = vector.broadcast %100 : vector<1x1xf32> to vector<1x32xf32>
    %102 = arith.mulf %92, %101 : vector<1x32xf32>
    %103 = arith.truncf %102 : vector<1x32xf32> to vector<1x32xbf16>
    %c0_46 = arith.constant 0 : index
    %c0_47 = arith.constant 0 : index
    %104 = vector.load %arg8[%c0_46, %c0_47] : memref<32x128xbf16, #tpu.memory_space<vmem>>, vector<32x128xbf16>
    %cst_48 = arith.constant dense<0.000000e+00> : vector<1x128xf32>
    %105 = tpu.matmul %103, %104, %cst_48 {dimension_numbers = #tpu.dot_dimension_numbers<[1], [0], [0], [1], [0, 0, 1, 1], [], []>} : vector<1x32xbf16>, vector<32x128xbf16>, vector<1x128xf32> -> vector<1x128xf32>
    %cst_49 = arith.constant 0.000000e+00 : f32
    %106 = vector.broadcast %cst_49 : f32 to vector<1x128xf32>
    %107 = arith.maximumf %105, %106 : vector<1x128xf32>
    %108 = arith.truncf %107 : vector<1x128xf32> to vector<1x128xbf16>
    %c0_50 = arith.constant 0 : index
    %c0_51 = arith.constant 0 : index
    %109 = vector.load %arg9[%c0_50, %c0_51] : memref<128x32xbf16, #tpu.memory_space<vmem>>, vector<128x32xbf16>
    %cst_52 = arith.constant dense<0.000000e+00> : vector<1x32xf32>
    %110 = tpu.matmul %108, %109, %cst_52 {dimension_numbers = #tpu.dot_dimension_numbers<[1], [0], [0], [1], [0, 0, 1, 1], [], []>} : vector<1x128xbf16>, vector<128x32xbf16>, vector<1x32xf32> -> vector<1x32xf32>
    %111 = arith.addf %92, %110 : vector<1x32xf32>
    %112 = arith.mulf %111, %111 : vector<1x32xf32>
    %cst_53 = arith.constant dense<0.000000e+00> : vector<1xf32>
    %113 = vector.multi_reduction <add>, %112, %cst_53 [1] : vector<1x32xf32> to vector<1xf32>
    %114 = vector.shape_cast %113 : vector<1xf32> to vector<1x1xf32>
    %cst_54 = arith.constant 3.200000e+01 : f32
    %115 = vector.broadcast %cst_54 : f32 to vector<1x1xf32>
    %116 = arith.divf %114, %115 : vector<1x1xf32>
    %cst_55 = arith.constant 9.99999997E-7 : f32
    %117 = vector.broadcast %cst_55 : f32 to vector<1x1xf32>
    %118 = arith.addf %116, %117 : vector<1x1xf32>
    %119 = math.rsqrt %118 : vector<1x1xf32>
    %120 = vector.broadcast %119 : vector<1x1xf32> to vector<1x32xf32>
    %121 = arith.mulf %111, %120 : vector<1x32xf32>
    %122 = arith.truncf %121 : vector<1x32xf32> to vector<1x32xbf16>
    %c0_56 = arith.constant 0 : index
    %c0_57 = arith.constant 0 : index
    %123 = vector.load %arg10[%c0_56, %c0_57] : memref<32x128xbf16, #tpu.memory_space<vmem>>, vector<32x128xbf16>
    %cst_58 = arith.constant dense<0.000000e+00> : vector<1x128xf32>
    %124 = tpu.matmul %122, %123, %cst_58 {dimension_numbers = #tpu.dot_dimension_numbers<[1], [0], [0], [1], [0, 0, 1, 1], [], []>} : vector<1x32xbf16>, vector<32x128xbf16>, vector<1x128xf32> -> vector<1x128xf32>
    %c0_59 = arith.constant 0 : index
    %c0_60 = arith.constant 0 : index
    %125 = vector.load %arg13[%c0_59, %c0_60] : memref<1x128xf32, #tpu.memory_space<vmem>>, vector<1x128xf32>
    tpu.vector_store %arg13[%c0_59, %c0_60], %124 {strides = array<i32>} : memref<1x128xf32, #tpu.memory_space<vmem>>, vector<1x128xf32>,
    return
  }
}

</mosaic_0001>

<llo_original>
// kernel: generate.1
$region0: #{generate.1}
  #allocation0 [shape = 'u32[]', space=smem, size = 0x4, offset = 0x4, fixed_abs, tag = 'smem constant byte address 0x4 - core index']
  #allocation1 [shape = 'u32[144,128]{1,0:T(1,128)}', space=vmem, size = 0x12000, scoped, tag = 'internal scratch']
  %s0 = inlined_call_operand.vmem [shape: f32[8,32], index: 0, kind: input, shape index: {}]
  %s1 = inlined_call_operand.vmem [shape: bf16[32,32], index: 1, kind: input, shape index: {}]
  %s2 = inlined_call_operand.hbm [shape: bf16[32,32], index: 2, kind: input, shape index: {}]
  %s3 = inlined_call_operand.vmem [shape: f32[8,32], index: 3, kind: output, shape index: {0}]
  %s4 = inlined_call_operand.vmem [shape: f32[8,32], index: 4, kind: output, shape index: {1}]
  %5 = xla_tuple %s3, %s4
  %s6 = sld [smem:[#allocation0]]
  $region34: #{generate.1} parent=0
    _
  %s8 = ssub.s32 1, %s6
  %s9 = scalar_select 0, %s8, %s6
  $region1: #{generate.1} parent=0
    #allocation2 [shape = 'u8[8192]{0}', space=vmem, size = 0x2000, scoped, tag = 'input window, operand 2, single buffered']
    #allocation3 [shape = 's32[1]{0}', space=sflag, size = 0x4, scoped, tag = 'scoped memory for generate.1']
    %10 = vsyncpa [#allocation3], 0
    // Predicated region
    $region2: #{generate.1} parent=1 // pred_check
      _
    $region3: #{generate.1} parent=1 // pred_check_branch
      %12 = sbr.rel (0) target = $region5
    $region4: #{generate.1} parent=1 // pred_region
      _
    $region5: #{generate.1} parent=1 // pred_fallthru
      _
    // Predicated region
    $region6: #{generate.1} parent=1 // pred_check
      _
    $region7: #{generate.1} parent=1 // pred_check_branch
      %14 = sbr.rel (0) target = $region9
    $region8: #{generate.1} parent=1 // pred_region
      _
    $region9: #{generate.1} parent=1 // pred_fallthru
      _
    // Predicated region
    $region10: #{generate.1} parent=1 // pred_check
      _
    $region11: #{generate.1} parent=1 // pred_check_branch
      %16 = sbr.rel (0) target = $region13
    $region12: #{generate.1} parent=1 // pred_region
      %s18 = ssub.s32 256, 256
      %19 = vsyncadd [#allocation3], %s18
      %s20 = sshll.u32 [#allocation2], 4
      %s21 = int_to_ptr.vmem [resolvable:$true] %s20
      %26 = dma.hbm_to_vmem [thread:$0]  %s2, 256, %s21, [#allocation3], 64, 64, 4
    $region13: #{generate.1} parent=1 // pred_fallthru
      _
    // Predicated region
    $region14: #{generate.1} parent=1 // pred_check
      _
    $region15: #{generate.1} parent=1 // pred_check_branch
      %28 = sbr.rel (0) target = $region17
    $region16: #{generate.1} parent=1 // pred_region
      %29 = dma.done [#allocation3], 256
    $region17: #{generate.1} parent=1 // pred_fallthru
      _
    %v31 = vld [vmem:[%s0] sm:$0xff]
    %v32 = vpack.c.bf16 %v31, %v31
    %v33 = vld [vmem:[%s1] sm:$0xf]
    %v34 = vld [vmem:[%s1 + $0x4] sm:$0xf]
    %v35 = vld [vmem:[%s1 + $0x8] sm:$0xf]
    %v36 = vld [vmem:[%s1 + $0xc] sm:$0xf]
    %v41 = vunpack.c.l.b16 %v33
    %v42 = vunpack.c.l.b16 %v34
    %v43 = vunpack.c.l.b16 %v35
    %v44 = vunpack.c.l.b16 %v36
    %v45 = vpack.c.b16 %v42, %v41
    %v46 = vpack.c.b16 %v44, %v43
    %vm49 = vcmask 261120
    %v51 = vsel %vm49, %v32, 0
    %53 = vmatprep.subr.bf16.mxu0 0
    %54 = vmatpush1.bf16.msra.mxu0 %v45
    %55 = vmatprep.subr.bf16.mxu0 0
    %56 = vmatpush1.bf16.msra.mxu0 %v46
    %57 = vmatprep.subr.bf16.mxu0 0
    %58 = vmatpush1.bf16.msra.mxu0 0
    %59 = vmatprep.subr.bf16.mxu0 0
    %60 = vmatpush1.bf16.msra.mxu0 0
    %61 = vmatprep.subr.bf16.mxu0 0
    %62 = vmatpush1.bf16.msra.mxu0 0
    %63 = vmatprep.subr.bf16.mxu0 0
    %64 = vmatpush1.bf16.msra.mxu0 0
    %65 = vmatprep.subr.bf16.mxu0 0
    %66 = vmatpush1.bf16.msra.mxu0 0
    %67 = vmatprep.subr.bf16.mxu0 0
    %68 = vmatpush1.bf16.msra.mxu0 0
    %69 = vmatprep.subr.bf16.mxu0 0
    %70 = vmatpush1.bf16.msra.mxu0 0
    %71 = vmatprep.subr.bf16.mxu0 0
    %72 = vmatpush1.bf16.msra.mxu0 0
    %73 = vmatprep.subr.bf16.mxu0 0
    %74 = vmatpush1.bf16.msra.mxu0 0
    %75 = vmatprep.subr.bf16.mxu0 0
    %76 = vmatpush1.bf16.msra.mxu0 0
    %77 = vmatprep.subr.bf16.mxu0 0
    %78 = vmatpush1.bf16.msra.mxu0 0
    %79 = vmatprep.subr.bf16.mxu0 0
    %80 = vmatpush1.bf16.msra.mxu0 0
    %81 = vmatprep.subr.bf16.mxu0 0
    %82 = vmatpush1.bf16.msra.mxu0 0
    %83 = vmatprep.subr.bf16.mxu0 0
    %84 = vmatpush1.bf16.msra.mxu0 0
    %85 = vmatprep.mubr.bf16.mxu0 0
    %86 = vmatmul.mubr.bf16.gmra.mrb[0].mxu0 %v51
    %v87 = vpop.f32.mrb[0].mxu0
    %v88 = vadd.f32 0.0, %v87
    %v89 = vpop.f32.mrb[0].mxu0
    %v90 = vpop.f32.mrb[0].mxu0
    %v91 = vpop.f32.mrb[0].mxu0
    %92 = vdwg.mxu0
    %93 = vst.msk [vmem:[%s3] sm:$0xff] %vm49, %v88
    %v94 = vld [vmem:[#allocation2] sm:$0xf]
    %v95 = vld [vmem:[#allocation2 + $0x4] sm:$0xf]
    %v96 = vld [vmem:[#allocation2 + $0x8] sm:$0xf]
    %v97 = vld [vmem:[#allocation2 + $0xc] sm:$0xf]
    %v102 = vunpack.c.l.b16 %v94
    %v103 = vunpack.c.l.b16 %v95
    %v104 = vunpack.c.l.b16 %v96
    %v105 = vunpack.c.l.b16 %v97
    %v106 = vpack.c.b16 %v103, %v102
    %v107 = vpack.c.b16 %v105, %v104
    %110 = vmatprep.subr.bf16.mxu0 0
    %111 = vmatpush1.bf16.msra.mxu0 %v106
    %112 = vmatprep.subr.bf16.mxu0 0
    %113 = vmatpush1.bf16.msra.mxu0 %v107
    %114 = vmatprep.subr.bf16.mxu0 0
    %115 = vmatpush1.bf16.msra.mxu0 0
    %116 = vmatprep.subr.bf16.mxu0 0
    %117 = vmatpush1.bf16.msra.mxu0 0
    %118 = vmatprep.subr.bf16.mxu0 0
    %119 = vmatpush1.bf16.msra.mxu0 0
    %120 = vmatprep.subr.bf16.mxu0 0
    %121 = vmatpush1.bf16.msra.mxu0 0
    %122 = vmatprep.subr.bf16.mxu0 0
    %123 = vmatpush1.bf16.msra.mxu0 0
    %124 = vmatprep.subr.bf16.mxu0 0
    %125 = vmatpush1.bf16.msra.mxu0 0
    %126 = vmatprep.subr.bf16.mxu0 0
    %127 = vmatpush1.bf16.msra.mxu0 0
    %128 = vmatprep.subr.bf16.mxu0 0
    %129 = vmatpush1.bf16.msra.mxu0 0
    %130 = vmatprep.subr.bf16.mxu0 0
    %131 = vmatpush1.bf16.msra.mxu0 0
    %132 = vmatprep.subr.bf16.mxu0 0
    %133 = vmatpush1.bf16.msra.mxu0 0
    %134 = vmatprep.subr.bf16.mxu0 0
    %135 = vmatpush1.bf16.msra.mxu0 0
    %136 = vmatprep.subr.bf16.mxu0 0
    %137 = vmatpush1.bf16.msra.mxu0 0
    %138 = vmatprep.subr.bf16.mxu0 0
    %139 = vmatpush1.bf16.msra.mxu0 0
    %140 = vmatprep.subr.bf16.mxu0 0
    %141 = vmatpush1.bf16.msra.mxu0 0
    %142 = vmatprep.mubr.bf16.mxu0 0
    %143 = vmatmul.mubr.bf16.gmra.mrb[0].mxu0 %v51
    %v144 = vpop.f32.mrb[0].mxu0
    %v145 = vadd.f32 0.0, %v144
    %v146 = vpop.f32.mrb[0].mxu0
    %v147 = vpop.f32.mrb[0].mxu0
    %v148 = vpop.f32.mrb[0].mxu0
    %149 = vdwg.mxu0
    %150 = vst.msk [vmem:[%s4] sm:$0xff] %vm49, %v145
    // Predicated region
    $region18: #{generate.1} parent=1 // pred_check
      _
    $region19: #{generate.1} parent=1 // pred_check_branch
      %152 = sbr.rel (0) target = $region21
    $region20: #{generate.1} parent=1 // pred_region
      _
    $region21: #{generate.1} parent=1 // pred_fallthru
      _
    // Predicated region
    $region22: #{generate.1} parent=1 // pred_check
      _
    $region23: #{generate.1} parent=1 // pred_check_branch
      %154 = sbr.rel (0) target = $region25
    $region24: #{generate.1} parent=1 // pred_region
      _
    $region25: #{generate.1} parent=1 // pred_fallthru
      _
    // Predicated region
    $region26: #{generate.1} parent=1 // pred_check
      _
    $region27: #{generate.1} parent=1 // pred_check_branch
      %156 = sbr.rel (0) target = $region29
    $region28: #{generate.1} parent=1 // pred_region
      _
    $region29: #{generate.1} parent=1 // pred_fallthru
      _
    // Predicated region
    $region30: #{generate.1} parent=1 // pred_check
      _
    $region31: #{generate.1} parent=1 // pred_check_branch
      %158 = sbr.rel (0) target = $region33
    $region32: #{generate.1} parent=1 // pred_region
      _
    $region33: #{generate.1} parent=1 // pred_fallthru
      _
    %159 = vsyncpa [#allocation3], 1

// kernel: body.10
$region0: #{body.10}
  #allocation0 [shape = 'u32[]', space=smem, size = 0x4, offset = 0x4, fixed_abs, tag = 'smem constant byte address 0x4 - core index']
  #allocation1 [shape = 'u32[144,128]{1,0:T(1,128)}', space=vmem, size = 0x12000, scoped, tag = 'internal scratch']
  %s0 = inlined_call_operand.vmem [shape: s32[2], index: 0, kind: input, shape index: {}]
  %s1 = inlined_call_operand.vmem [shape: f32[128,32], index: 1, kind: input, shape index: {}]
  %s2 = inlined_call_operand.vmem [shape: f32[8,32], index: 2, kind: input, shape index: {}]
  %s3 = inlined_call_operand.vmem [shape: f32[8,32], index: 3, kind: input, shape index: {}]
  %s4 = inlined_call_operand.vmem [shape: bf16[32,128], index: 4, kind: input, shape index: {}]
  %s5 = inlined_call_operand.vmem [shape: bf16[32,32], index: 5, kind: input, shape index: {}]
  %s6 = inlined_call_operand.vmem [shape: bf16[32,32], index: 6, kind: input, shape index: {}]
  %s7 = inlined_call_operand.vmem [shape: bf16[32,32], index: 7, kind: input, shape index: {}]
  %s8 = inlined_call_operand.vmem [shape: bf16[32,128], index: 8, kind: input, shape index: {}]
  %s9 = inlined_call_operand.vmem [shape: bf16[128,32], index: 9, kind: input, shape index: {}]
  %s10 = inlined_call_operand.vmem [shape: bf16[32,128], index: 10, kind: input, shape index: {}]
  %s11 = inlined_call_operand.vmem [shape: f32[8,32], index: 11, kind: input, shape index: {}, may-alias: {11,14}]
  %s12 = inlined_call_operand.vmem [shape: f32[8,32], index: 12, kind: input, shape index: {}, may-alias: {12,15}]
  %s13 = inlined_call_operand.vmem [shape: f32[1,128], index: 13, kind: output, shape index: {0}]
  %s14 = inlined_call_operand.vmem [shape: f32[8,32], index: 14, kind: output, shape index: {1}, may-alias: {11,14}]
  %s15 = inlined_call_operand.vmem [shape: f32[8,32], index: 15, kind: output, shape index: {2}, may-alias: {12,15}]
  %16 = xla_tuple %s13, %s14, %s15
  %s17 = sld [smem:[#allocation0]]
  $region82: #{body.10} parent=0
    _
  %s19 = ssub.s32 1, %s17
  %s20 = scalar_select 0, %s19, %s17
  $region1: #{body.10} parent=0
    #allocation2 [shape = 'u8[512]{0}', space=smem, size = 0x200, scoped, tag = 'input window, operand 0, single buffered']
    #allocation3 [shape = 's32[1]{0}', space=sflag, size = 0x4, scoped, tag = 'scoped memory for body.10']
    %21 = vsyncpa [#allocation3], 0
    // Predicated region
    $region2: #{body.10} parent=1 // pred_check
      _
    $region3: #{body.10} parent=1 // pred_check_branch
      %23 = sbr.rel (0) target = $region5
    $region4: #{body.10} parent=1 // pred_region
      %s25 = ssub.s32 16, 16
      %26 = vsyncadd [#allocation3], %s25
      %s28 = sshll.u32 %s0, 4
      %s29 = int_to_ptr.vmem [resolvable:$true] %s28
      %31 = dma.vmem_to_smem %s29, 16, [#allocation2], [#allocation3]
    $region5: #{body.10} parent=1 // pred_fallthru
      _
    // Predicated region
    $region6: #{body.10} parent=1 // pred_check
      _
    $region7: #{body.10} parent=1 // pred_check_branch
      %33 = sbr.rel (0) target = $region9
    $region8: #{body.10} parent=1 // pred_region
      _
    $region9: #{body.10} parent=1 // pred_fallthru
      _
    // Predicated region
    $region10: #{body.10} parent=1 // pred_check
      _
    $region11: #{body.10} parent=1 // pred_check_branch
      %35 = sbr.rel (0) target = $region13
    $region12: #{body.10} parent=1 // pred_region
      _
    $region13: #{body.10} parent=1 // pred_fallthru
      _
    // Predicated region
    $region14: #{body.10} parent=1 // pred_check
      _
    $region15: #{body.10} parent=1 // pred_check_branch
      %37 = sbr.rel (0) target = $region17
    $region16: #{body.10} parent=1 // pred_region
      _
    $region17: #{body.10} parent=1 // pred_fallthru
      _
    // Predicated region
    $region18: #{body.10} parent=1 // pred_check
      _
    $region19: #{body.10} parent=1 // pred_check_branch
      %39 = sbr.rel (0) target = $region21
    $region20: #{body.10} parent=1 // pred_region
      _
    $region21: #{body.10} parent=1 // pred_fallthru
      _
    // Predicated region
    $region22: #{body.10} parent=1 // pred_check
      _
    $region23: #{body.10} parent=1 // pred_check_branch
      %41 = sbr.rel (0) target = $region25
    $region24: #{body.10} parent=1 // pred_region
      _
    $region25: #{body.10} parent=1 // pred_fallthru
      _
    // Predicated region
    $region26: #{body.10} parent=1 // pred_check
      _
    $region27: #{body.10} parent=1 // pred_check_branch
      %43 = sbr.rel (0) target = $region29
    $region28: #{body.10} parent=1 // pred_region
      _
    $region29: #{body.10} parent=1 // pred_fallthru
      _
    // Predicated region
    $region30: #{body.10} parent=1 // pred_check
      _
    $region31: #{body.10} parent=1 // pred_check_branch
      %45 = sbr.rel (0) target = $region33
    $region32: #{body.10} parent=1 // pred_region
      _
    $region33: #{body.10} parent=1 // pred_fallthru
      _
    // Predicated region
    $region34: #{body.10} parent=1 // pred_check
      _
    $region35: #{body.10} parent=1 // pred_check_branch
      %47 = sbr.rel (0) target = $region37
    $region36: #{body.10} parent=1 // pred_region
      _
    $region37: #{body.10} parent=1 // pred_fallthru
      _
    // Predicated region
    $region38: #{body.10} parent=1 // pred_check
      _
    $region39: #{body.10} parent=1 // pred_check_branch
      %49 = sbr.rel (0) target = $region41
    $region40: #{body.10} parent=1 // pred_region
      _
    $region41: #{body.10} parent=1 // pred_fallthru
      _
    // Predicated region
    $region42: #{body.10} parent=1 // pred_check
      _
    $region43: #{body.10} parent=1 // pred_check_branch
      %51 = sbr.rel (0) target = $region45
    $region44: #{body.10} parent=1 // pred_region
      _
    $region45: #{body.10} parent=1 // pred_fallthru
      _
    // Predicated region
    $region46: #{body.10} parent=1 // pred_check
      _
    $region47: #{body.10} parent=1 // pred_check_branch
      %53 = sbr.rel (0) target = $region49
    $region48: #{body.10} parent=1 // pred_region
      _
    $region49: #{body.10} parent=1 // pred_fallthru
      _
    // Predicated region
    $region50: #{body.10} parent=1 // pred_check
      _
    $region51: #{body.10} parent=1 // pred_check_branch
      %55 = sbr.rel (0) target = $region53
    $region52: #{body.10} parent=1 // pred_region
      _
    $region53: #{body.10} parent=1 // pred_fallthru
      _
    // Predicated region
    $region54: #{body.10} parent=1 // pred_check
      _
    $region55: #{body.10} parent=1 // pred_check_branch
      %57 = sbr.rel (0) target = $region57
    $region56: #{body.10} parent=1 // pred_region
      %58 = dma.done [#allocation3], 16
    $region57: #{body.10} parent=1 // pred_fallthru
      _
    %59 = sfence
    %s61 = sld [smem:[#allocation2]]
    %s62 = sld [smem:[#allocation2 + $0x1]]
    %s63 = scalar_lea.vmem %s1, %s62
    %v64 = vld [vmem:[%s63] sm:$0x1]
    %v65 = vmul.f32 %v64, %v64
    %vm66 = vcmask 253952
    %v67 = vsel %vm66, %v65, 0.0
    %68 = vadd.xlane.f32.xlu0 %v67
    %v69 = vpop.xlane.xlu0 %68
    %v70 = vrcp.pop 32.0
    %v71 = vmul.f32 %v69, %v70
    %v72 = vadd.f32 %v71, 1e-06
    %v73 = vrsqrt.pop %v72
    %v74 = vmul.f32 %v64, %v73
    %v75 = vpack.c.bf16 %v74, %v74
    %v76 = vld [vmem:[%s4] sm:$0xf]
    %v77 = vld [vmem:[%s4 + $0x4] sm:$0xf]
    %v78 = vld [vmem:[%s4 + $0x8] sm:$0xf]
    %v79 = vld [vmem:[%s4 + $0xc] sm:$0xf]
    %v84 = vunpack.c.l.b16 %v76
    %v85 = vunpack.c.l.b16 %v77
    %v86 = vunpack.c.l.b16 %v78
    %v87 = vunpack.c.l.b16 %v79
    %v88 = vpack.c.b16 %v85, %v84
    %v89 = vpack.c.b16 %v87, %v86
    %vm92 = vcmask 261120
    %v94 = vsel %vm92, %v75, 0
    %96 = vmatprep.subr.bf16.mxu0 0
    %97 = vmatpush1.bf16.msra.mxu0 %v88
    %98 = vmatprep.subr.bf16.mxu0 0
    %99 = vmatpush1.bf16.msra.mxu0 %v89
    %100 = vmatprep.subr.bf16.mxu0 0
    %101 = vmatpush1.bf16.msra.mxu0 0
    %102 = vmatprep.subr.bf16.mxu0 0
    %103 = vmatpush1.bf16.msra.mxu0 0
    %104 = vmatprep.subr.bf16.mxu0 0
    %105 = vmatpush1.bf16.msra.mxu0 0
    %106 = vmatprep.subr.bf16.mxu0 0
    %107 = vmatpush1.bf16.msra.mxu0 0
    %108 = vmatprep.subr.bf16.mxu0 0
    %109 = vmatpush1.bf16.msra.mxu0 0
    %110 = vmatprep.subr.bf16.mxu0 0
    %111 = vmatpush1.bf16.msra.mxu0 0
    %112 = vmatprep.subr.bf16.mxu0 0
    %113 = vmatpush1.bf16.msra.mxu0 0
    %114 = vmatprep.subr.bf16.mxu0 0
    %115 = vmatpush1.bf16.msra.mxu0 0
    %116 = vmatprep.subr.bf16.mxu0 0
    %117 = vmatpush1.bf16.msra.mxu0 0
    %118 = vmatprep.subr.bf16.mxu0 0
    %119 = vmatpush1.bf16.msra.mxu0 0
    %120 = vmatprep.subr.bf16.mxu0 0
    %121 = vmatpush1.bf16.msra.mxu0 0
    %122 = vmatprep.subr.bf16.mxu0 0
    %123 = vmatpush1.bf16.msra.mxu0 0
    %124 = vmatprep.subr.bf16.mxu0 0
    %125 = vmatpush1.bf16.msra.mxu0 0
    %126 = vmatprep.subr.bf16.mxu0 0
    %127 = vmatpush1.bf16.msra.mxu0 0
    %128 = vmatprep.mubr.bf16.mxu0 0
    %129 = vmatmul.mubr.bf16.gmra.mrb[0].mxu0 %v94
    %v130 = vpop.f32.mrb[0].mxu0
    %v131 = vadd.f32 0.0, %v130
    %v132 = vpop.f32.mrb[0].mxu0
    %v133 = vpop.f32.mrb[0].mxu0
    %v134 = vpop.f32.mrb[0].mxu0
    %135 = vdwg.mxu0
    %v136 = vlaneseq
    %v137 = vshrl.u32 %v136, 7
    %v138 = vstv %s61
    %vm139 = vcmp.eq.s32.totalorder %v137, %v138
    %v140 = vlaneseq
    %v141 = vshrl.u32 %v140, 7
    %v142 = vsub.s32 0, %v141
    %v143 = vrot.slane %v131, %v142
    %v144 = vld [vmem:[%s11] sm:$0xff]
    %146 = vrot.lane.b32.xlu0 %v144, 32
    %v147 = vpop.permute.xlu0 %146
    %v149 = vsel %vm139, %v143, %v147
    %v150 = vld [vmem:[%s12] sm:$0xff]
    %152 = vrot.lane.b32.xlu0 %v150, 64
    %v153 = vpop.permute.xlu0 %152
    %v155 = vsel %vm139, %v143, %v153
    %157 = vrot.lane.b32.xlu0 %v149, 96
    %v158 = vpop.permute.xlu0 %157
    %160 = vst.msk [vmem:[%s14] sm:$0xff] %vm92, %v158
    %162 = vrot.lane.b32.xlu0 %v155, 64
    %v163 = vpop.permute.xlu0 %162
    %165 = vst.msk [vmem:[%s15] sm:$0xff] %vm92, %v163
    %v167 = vsel %vm92, %v131, 0
    %v169 = vsel %vm92, %v158, 0
    %171 = vmatprep.subr.mxu0 0.0
    %172 = vmatpush1.xpose.msra.mxu0 %v169
    %173 = vmatprep.subr.mxu0 0.0
    %174 = vmatpush1.xpose.msra.mxu0 0.0
    %175 = vmatprep.subr.mxu0 0.0
    %176 = vmatpush1.xpose.msra.mxu0 0.0
    %177 = vmatprep.subr.mxu0 0.0
    %178 = vmatpush1.xpose.msra.mxu0 0.0
    %179 = vmatprep.subr.mxu0 0.0
    %180 = vmatpush1.xpose.msra.mxu0 0.0
    %181 = vmatprep.subr.mxu0 0.0
    %182 = vmatpush1.xpose.msra.mxu0 0.0
    %183 = vmatprep.subr.mxu0 0.0
    %184 = vmatpush1.xpose.msra.mxu0 0.0
    %185 = vmatprep.subr.mxu0 0.0
    %186 = vmatpush1.xpose.msra.mxu0 0.0
    %187 = vmatprep.subr.mxu0 0.0
    %188 = vmatpush1.xpose.msra.mxu0 0.0
    %189 = vmatprep.subr.mxu0 0.0
    %190 = vmatpush1.xpose.msra.mxu0 0.0
    %191 = vmatprep.subr.mxu0 0.0
    %192 = vmatpush1.xpose.msra.mxu0 0.0
    %193 = vmatprep.subr.mxu0 0.0
    %194 = vmatpush1.xpose.msra.mxu0 0.0
    %195 = vmatprep.subr.mxu0 0.0
    %196 = vmatpush1.xpose.msra.mxu0 0.0
    %197 = vmatprep.subr.mxu0 0.0
    %198 = vmatpush1.xpose.msra.mxu0 0.0
    %199 = vmatprep.subr.mxu0 0.0
    %200 = vmatpush1.xpose.msra.mxu0 0.0
    %201 = vmatprep.subr.mxu0 0.0
    %202 = vmatpush1.xpose.msra.mxu0 0.0
    %203 = vmatprep.subr.mxu0 0.0
    %204 = vmatpush1.xpose.msra.mxu0 0.0
    %205 = vmatprep.subr.mxu0 0.0
    %206 = vmatpush1.xpose.msra.mxu0 0.0
    %207 = vmatprep.subr.mxu0 0.0
    %208 = vmatpush1.xpose.msra.mxu0 0.0
    %209 = vmatprep.subr.mxu0 0.0
    %210 = vmatpush1.xpose.msra.mxu0 0.0
    %211 = vmatprep.subr.mxu0 0.0
    %212 = vmatpush1.xpose.msra.mxu0 0.0
    %213 = vmatprep.subr.mxu0 0.0
    %214 = vmatpush1.xpose.msra.mxu0 0.0
    %215 = vmatprep.subr.mxu0 0.0
    %216 = vmatpush1.xpose.msra.mxu0 0.0
    %217 = vmatprep.subr.mxu0 0.0
    %218 = vmatpush1.xpose.msra.mxu0 0.0
    %219 = vmatprep.subr.mxu0 0.0
    %220 = vmatpush1.xpose.msra.mxu0 0.0
    %221 = vmatprep.subr.mxu0 0.0
    %222 = vmatpush1.xpose.msra.mxu0 0.0
    %223 = vmatprep.subr.mxu0 0.0
    %224 = vmatpush1.xpose.msra.mxu0 0.0
    %225 = vmatprep.subr.mxu0 0.0
    %226 = vmatpush1.xpose.msra.mxu0 0.0
    %227 = vmatprep.subr.mxu0 0.0
    %228 = vmatpush1.xpose.msra.mxu0 0.0
    %229 = vmatprep.subr.mxu0 0.0
    %230 = vmatpush1.xpose.msra.mxu0 0.0
    %231 = vmatprep.subr.mxu0 0.0
    %232 = vmatpush1.xpose.msra.mxu0 0.0
    %233 = vmatprep.subr.mxu0 0.0
    %234 = vmatpush1.xpose.msra.mxu0 0.0
    %235 = vmatprep.mubr.f32.mxu0 0.0
    %236 = vmatmul.mubr.f32.gmra.mrb[0].mxu0 %v167
    %v237 = vpop.f32.mrb[0].mxu0
    %v238 = vadd.f32 0.0, %v237
    %v239 = vpop.f32.mrb[0].mxu0
    %240 = vdwg.mxu0
    %v241 = vmul.f32 %v238, 0.17677669
    %v242 = vlaneseq
    %v243 = vand.u32 %v242, 127
    %vm244 = vcmp.le.s32.totalorder %v243, %v138
    %v245 = vsel %vm244, %v241, -1e+09
    %vm246 = vcmask 57344
    %v247 = vsel %vm246, %v245, -inf
    %248 = vmax.xlane.f32.xlu0 %v247
    %v249 = vpop.xlane.xlu0 %248
    %v250 = vsub.f32 %v245, %v249
    %v251 = vmul.f32 %v250, 1.442695
    %v252 = vpow.pop %v251
    %v253 = vsel %vm246, %v252, 0.0
    %254 = vadd.xlane.f32.xlu0 %v253
    %v255 = vpop.xlane.xlu0 %254
    %v256 = vrcp.pop %v255
    %v257 = vmul.f32 %v252, %v256
    %vm258 = vcmask 64512
    %v260 = vsel %vm258, %v257, 0
    %262 = vmatprep.subr.mxu0 0.0
    %263 = vmatpush1.msra.mxu0 %v163
    %264 = vmatprep.subr.mxu0 0.0
    %265 = vmatpush1.msra.mxu0 0.0
    %266 = vmatprep.subr.mxu0 0.0
    %267 = vmatpush1.msra.mxu0 0.0
    %268 = vmatprep.subr.mxu0 0.0
    %269 = vmatpush1.msra.mxu0 0.0
    %270 = vmatprep.subr.mxu0 0.0
    %271 = vmatpush1.msra.mxu0 0.0
    %272 = vmatprep.subr.mxu0 0.0
    %273 = vmatpush1.msra.mxu0 0.0
    %274 = vmatprep.subr.mxu0 0.0
    %275 = vmatpush1.msra.mxu0 0.0
    %276 = vmatprep.subr.mxu0 0.0
    %277 = vmatpush1.msra.mxu0 0.0
    %278 = vmatprep.subr.mxu0 0.0
    %279 = vmatpush1.msra.mxu0 0.0
    %280 = vmatprep.subr.mxu0 0.0
    %281 = vmatpush1.msra.mxu0 0.0
    %282 = vmatprep.subr.mxu0 0.0
    %283 = vmatpush1.msra.mxu0 0.0
    %284 = vmatprep.subr.mxu0 0.0
    %285 = vmatpush1.msra.mxu0 0.0
    %286 = vmatprep.subr.mxu0 0.0
    %287 = vmatpush1.msra.mxu0 0.0
    %288 = vmatprep.subr.mxu0 0.0
    %289 = vmatpush1.msra.mxu0 0.0
    %290 = vmatprep.subr.mxu0 0.0
    %291 = vmatpush1.msra.mxu0 0.0
    %292 = vmatprep.subr.mxu0 0.0
    %293 = vmatpush1.msra.mxu0 0.0
    %294 = vmatprep.subr.mxu0 0.0
    %295 = vmatpush1.msra.mxu0 0.0
    %296 = vmatprep.subr.mxu0 0.0
    %297 = vmatpush1.msra.mxu0 0.0
    %298 = vmatprep.subr.mxu0 0.0
    %299 = vmatpush1.msra.mxu0 0.0
    %300 = vmatprep.subr.mxu0 0.0
    %301 = vmatpush1.msra.mxu0 0.0
    %302 = vmatprep.subr.mxu0 0.0
    %303 = vmatpush1.msra.mxu0 0.0
    %304 = vmatprep.subr.mxu0 0.0
    %305 = vmatpush1.msra.mxu0 0.0
    %306 = vmatprep.subr.mxu0 0.0
    %307 = vmatpush1.msra.mxu0 0.0
    %308 = vmatprep.subr.mxu0 0.0
    %309 = vmatpush1.msra.mxu0 0.0
    %310 = vmatprep.subr.mxu0 0.0
    %311 = vmatpush1.msra.mxu0 0.0
    %312 = vmatprep.subr.mxu0 0.0
    %313 = vmatpush1.msra.mxu0 0.0
    %314 = vmatprep.subr.mxu0 0.0
    %315 = vmatpush1.msra.mxu0 0.0
    %316 = vmatprep.subr.mxu0 0.0
    %317 = vmatpush1.msra.mxu0 0.0
    %318 = vmatprep.subr.mxu0 0.0
    %319 = vmatpush1.msra.mxu0 0.0
    %320 = vmatprep.subr.mxu0 0.0
    %321 = vmatpush1.msra.mxu0 0.0
    %322 = vmatprep.subr.mxu0 0.0
    %323 = vmatpush1.msra.mxu0 0.0
    %324 = vmatprep.subr.mxu0 0.0
    %325 = vmatpush1.msra.mxu0 0.0
    %326 = vmatprep.mubr.f32.mxu0 0.0
    %327 = vmatmul.mubr.f32.gmra.mrb[0].mxu0 %v260
    %v328 = vpop.f32.mrb[0].mxu0
    %v329 = vadd.f32 0.0, %v328
    %v330 = vpop.f32.mrb[0].mxu0
    %331 = vdwg.mxu0
    %v332 = vpack.c.bf16 %v329, %v329
    %v333 = vld [vmem:[%s5] sm:$0xf]
    %v334 = vld [vmem:[%s5 + $0x4] sm:$0xf]
    %v335 = vld [vmem:[%s5 + $0x8] sm:$0xf]
    %v336 = vld [vmem:[%s5 + $0xc] sm:$0xf]
    %v341 = vunpack.c.l.b16 %v333
    %v342 = vunpack.c.l.b16 %v334
    %v343 = vunpack.c.l.b16 %v335
    %v344 = vunpack.c.l.b16 %v336
    %v345 = vpack.c.b16 %v342, %v341
    %v346 = vpack.c.b16 %v344, %v343
    %v350 = vsel %vm92, %v332, 0
    %352 = vmatprep.subr.bf16.mxu0 0
    %353 = vmatpush1.bf16.msra.mxu0 %v345
    %354 = vmatprep.subr.bf16.mxu0 0
    %355 = vmatpush1.bf16.msra.mxu0 %v346
    %356 = vmatprep.subr.bf16.mxu0 0
    %357 = vmatpush1.bf16.msra.mxu0 0
    %358 = vmatprep.subr.bf16.mxu0 0
    %359 = vmatpush1.bf16.msra.mxu0 0
    %360 = vmatprep.subr.bf16.mxu0 0
    %361 = vmatpush1.bf16.msra.mxu0 0
    %362 = vmatprep.subr.bf16.mxu0 0
    %363 = vmatpush1.bf16.msra.mxu0 0
    %364 = vmatprep.subr.bf16.mxu0 0
    %365 = vmatpush1.bf16.msra.mxu0 0
    %366 = vmatprep.subr.bf16.mxu0 0
    %367 = vmatpush1.bf16.msra.mxu0 0
    %368 = vmatprep.subr.bf16.mxu0 0
    %369 = vmatpush1.bf16.msra.mxu0 0
    %370 = vmatprep.subr.bf16.mxu0 0
    %371 = vmatpush1.bf16.msra.mxu0 0
    %372 = vmatprep.subr.bf16.mxu0 0
    %373 = vmatpush1.bf16.msra.mxu0 0
    %374 = vmatprep.subr.bf16.mxu0 0
    %375 = vmatpush1.bf16.msra.mxu0 0
    %376 = vmatprep.subr.bf16.mxu0 0
    %377 = vmatpush1.bf16.msra.mxu0 0
    %378 = vmatprep.subr.bf16.mxu0 0
    %379 = vmatpush1.bf16.msra.mxu0 0
    %380 = vmatprep.subr.bf16.mxu0 0
    %381 = vmatpush1.bf16.msra.mxu0 0
    %382 = vmatprep.subr.bf16.mxu0 0
    %383 = vmatpush1.bf16.msra.mxu0 0
    %384 = vmatprep.mubr.bf16.mxu0 0
    %385 = vmatmul.mubr.bf16.gmra.mrb[0].mxu0 %v350
    %v386 = vpop.f32.mrb[0].mxu0
    %v387 = vadd.f32 0.0, %v386
    %v388 = vpop.f32.mrb[0].mxu0
    %v389 = vpop.f32.mrb[0].mxu0
    %v390 = vpop.f32.mrb[0].mxu0
    %391 = vdwg.mxu0
    %v392 = vadd.f32 %v64, %v387
    %v393 = vmul.f32 %v392, %v392
    %v394 = vsel %vm66, %v393, 0.0
    %395 = vadd.xlane.f32.xlu0 %v394
    %v396 = vpop.xlane.xlu0 %395
    %v397 = vmul.f32 %v396, %v70
    %v398 = vadd.f32 %v397, 1e-06
    %v399 = vrsqrt.pop %v398
    %v400 = vmul.f32 %v392, %v399
    %v401 = vpack.c.bf16 %v400, %v400
    %v402 = vld [vmem:[%s6] sm:$0xf]
    %v403 = vld [vmem:[%s6 + $0x4] sm:$0xf]
    %v404 = vld [vmem:[%s6 + $0x8] sm:$0xf]
    %v405 = vld [vmem:[%s6 + $0xc] sm:$0xf]
    %v410 = vunpack.c.l.b16 %v402
    %v411 = vunpack.c.l.b16 %v403
    %v412 = vunpack.c.l.b16 %v404
    %v413 = vunpack.c.l.b16 %v405
    %v414 = vpack.c.b16 %v411, %v410
    %v415 = vpack.c.b16 %v413, %v412
    %v419 = vsel %vm92, %v401, 0
    %421 = vmatprep.subr.bf16.mxu0 0
    %422 = vmatpush1.bf16.msra.mxu0 %v414
    %423 = vmatprep.subr.bf16.mxu0 0
    %424 = vmatpush1.bf16.msra.mxu0 %v415
    %425 = vmatprep.subr.bf16.mxu0 0
    %426 = vmatpush1.bf16.msra.mxu0 0
    %427 = vmatprep.subr.bf16.mxu0 0
    %428 = vmatpush1.bf16.msra.mxu0 0
    %429 = vmatprep.subr.bf16.mxu0 0
    %430 = vmatpush1.bf16.msra.mxu0 0
    %431 = vmatprep.subr.bf16.mxu0 0
    %432 = vmatpush1.bf16.msra.mxu0 0
    %433 = vmatprep.subr.bf16.mxu0 0
    %434 = vmatpush1.bf16.msra.mxu0 0
    %435 = vmatprep.subr.bf16.mxu0 0
    %436 = vmatpush1.bf16.msra.mxu0 0
    %437 = vmatprep.subr.bf16.mxu0 0
    %438 = vmatpush1.bf16.msra.mxu0 0
    %439 = vmatprep.subr.bf16.mxu0 0
    %440 = vmatpush1.bf16.msra.mxu0 0
    %441 = vmatprep.subr.bf16.mxu0 0
    %442 = vmatpush1.bf16.msra.mxu0 0
    %443 = vmatprep.subr.bf16.mxu0 0
    %444 = vmatpush1.bf16.msra.mxu0 0
    %445 = vmatprep.subr.bf16.mxu0 0
    %446 = vmatpush1.bf16.msra.mxu0 0
    %447 = vmatprep.subr.bf16.mxu0 0
    %448 = vmatpush1.bf16.msra.mxu0 0
    %449 = vmatprep.subr.bf16.mxu0 0
    %450 = vmatpush1.bf16.msra.mxu0 0
    %451 = vmatprep.subr.bf16.mxu0 0
    %452 = vmatpush1.bf16.msra.mxu0 0
    %453 = vmatprep.mubr.bf16.mxu0 0
    %454 = vmatmul.mubr.bf16.gmra.mrb[0].mxu0 %v419
    %v455 = vpop.f32.mrb[0].mxu0
    %v456 = vadd.f32 0.0, %v455
    %v457 = vpop.f32.mrb[0].mxu0
    %v458 = vpop.f32.mrb[0].mxu0
    %v459 = vpop.f32.mrb[0].mxu0
    %460 = vdwg.mxu0
    %v461 = vld [vmem:[%s2] sm:$0xff]
    %v463 = vsel %vm92, %v456, 0
    %v466 = vsel %vm92, %v461, 0
    %468 = vmatprep.subr.mxu0 0.0
    %469 = vmatpush1.xpose.msra.mxu0 %v466
    %470 = vmatprep.subr.mxu0 0.0
    %471 = vmatpush1.xpose.msra.mxu0 0.0
    %472 = vmatprep.subr.mxu0 0.0
    %473 = vmatpush1.xpose.msra.mxu0 0.0
    %474 = vmatprep.subr.mxu0 0.0
    %475 = vmatpush1.xpose.msra.mxu0 0.0
    %476 = vmatprep.subr.mxu0 0.0
    %477 = vmatpush1.xpose.msra.mxu0 0.0
    %478 = vmatprep.subr.mxu0 0.0
    %479 = vmatpush1.xpose.msra.mxu0 0.0
    %480 = vmatprep.subr.mxu0 0.0
    %481 = vmatpush1.xpose.msra.mxu0 0.0
    %482 = vmatprep.subr.mxu0 0.0
    %483 = vmatpush1.xpose.msra.mxu0 0.0
    %484 = vmatprep.subr.mxu0 0.0
    %485 = vmatpush1.xpose.msra.mxu0 0.0
    %486 = vmatprep.subr.mxu0 0.0
    %487 = vmatpush1.xpose.msra.mxu0 0.0
    %488 = vmatprep.subr.mxu0 0.0
    %489 = vmatpush1.xpose.msra.mxu0 0.0
    %490 = vmatprep.subr.mxu0 0.0
    %491 = vmatpush1.xpose.msra.mxu0 0.0
    %492 = vmatprep.subr.mxu0 0.0
    %493 = vmatpush1.xpose.msra.mxu0 0.0
    %494 = vmatprep.subr.mxu0 0.0
    %495 = vmatpush1.xpose.msra.mxu0 0.0
    %496 = vmatprep.subr.mxu0 0.0
    %497 = vmatpush1.xpose.msra.mxu0 0.0
    %498 = vmatprep.subr.mxu0 0.0
    %499 = vmatpush1.xpose.msra.mxu0 0.0
    %500 = vmatprep.subr.mxu0 0.0
    %501 = vmatpush1.xpose.msra.mxu0 0.0
    %502 = vmatprep.subr.mxu0 0.0
    %503 = vmatpush1.xpose.msra.mxu0 0.0
    %504 = vmatprep.subr.mxu0 0.0
    %505 = vmatpush1.xpose.msra.mxu0 0.0
    %506 = vmatprep.subr.mxu0 0.0
    %507 = vmatpush1.xpose.msra.mxu0 0.0
    %508 = vmatprep.subr.mxu0 0.0
    %509 = vmatpush1.xpose.msra.mxu0 0.0
    %510 = vmatprep.subr.mxu0 0.0
    %511 = vmatpush1.xpose.msra.mxu0 0.0
    %512 = vmatprep.subr.mxu0 0.0
    %513 = vmatpush1.xpose.msra.mxu0 0.0
    %514 = vmatprep.subr.mxu0 0.0
    %515 = vmatpush1.xpose.msra.mxu0 0.0
    %516 = vmatprep.subr.mxu0 0.0
    %517 = vmatpush1.xpose.msra.mxu0 0.0
    %518 = vmatprep.subr.mxu0 0.0
    %519 = vmatpush1.xpose.msra.mxu0 0.0
    %520 = vmatprep.subr.mxu0 0.0
    %521 = vmatpush1.xpose.msra.mxu0 0.0
    %522 = vmatprep.subr.mxu0 0.0
    %523 = vmatpush1.xpose.msra.mxu0 0.0
    %524 = vmatprep.subr.mxu0 0.0
    %525 = vmatpush1.xpose.msra.mxu0 0.0
    %526 = vmatprep.subr.mxu0 0.0
    %527 = vmatpush1.xpose.msra.mxu0 0.0
    %528 = vmatprep.subr.mxu0 0.0
    %529 = vmatpush1.xpose.msra.mxu0 0.0
    %530 = vmatprep.subr.mxu0 0.0
    %531 = vmatpush1.xpose.msra.mxu0 0.0
    %532 = vmatprep.mubr.f32.mxu0 0.0
    %533 = vmatmul.mubr.f32.gmra.mrb[0].mxu0 %v463
    %v534 = vpop.f32.mrb[0].mxu0
    %v535 = vadd.f32 0.0, %v534
    %v536 = vpop.f32.mrb[0].mxu0
    %537 = vdwg.mxu0
    %v538 = vmul.f32 %v535, 0.17677669
    %v539 = vsel %vm246, %v538, -inf
    %540 = vmax.xlane.f32.xlu0 %v539
    %v541 = vpop.xlane.xlu0 %540
    %v542 = vsub.f32 %v538, %v541
    %v543 = vmul.f32 %v542, 1.442695
    %v544 = vpow.pop %v543
    %v545 = vsel %vm246, %v544, 0.0
    %546 = vadd.xlane.f32.xlu0 %v545
    %v547 = vpop.xlane.xlu0 %546
    %v548 = vrcp.pop %v547
    %v549 = vmul.f32 %v544, %v548
    %v550 = vld [vmem:[%s3] sm:$0xff]
    %v552 = vsel %vm258, %v549, 0
    %554 = vmatprep.subr.mxu0 0.0
    %555 = vmatpush1.msra.mxu0 %v550
    %556 = vmatprep.subr.mxu0 0.0
    %557 = vmatpush1.msra.mxu0 0.0
    %558 = vmatprep.subr.mxu0 0.0
    %559 = vmatpush1.msra.mxu0 0.0
    %560 = vmatprep.subr.mxu0 0.0
    %561 = vmatpush1.msra.mxu0 0.0
    %562 = vmatprep.subr.mxu0 0.0
    %563 = vmatpush1.msra.mxu0 0.0
    %564 = vmatprep.subr.mxu0 0.0
    %565 = vmatpush1.msra.mxu0 0.0
    %566 = vmatprep.subr.mxu0 0.0
    %567 = vmatpush1.msra.mxu0 0.0
    %568 = vmatprep.subr.mxu0 0.0
    %569 = vmatpush1.msra.mxu0 0.0
    %570 = vmatprep.subr.mxu0 0.0
    %571 = vmatpush1.msra.mxu0 0.0
    %572 = vmatprep.subr.mxu0 0.0
    %573 = vmatpush1.msra.mxu0 0.0
    %574 = vmatprep.subr.mxu0 0.0
    %575 = vmatpush1.msra.mxu0 0.0
    %576 = vmatprep.subr.mxu0 0.0
    %577 = vmatpush1.msra.mxu0 0.0
    %578 = vmatprep.subr.mxu0 0.0
    %579 = vmatpush1.msra.mxu0 0.0
    %580 = vmatprep.subr.mxu0 0.0
    %581 = vmatpush1.msra.mxu0 0.0
    %582 = vmatprep.subr.mxu0 0.0
    %583 = vmatpush1.msra.mxu0 0.0
    %584 = vmatprep.subr.mxu0 0.0
    %585 = vmatpush1.msra.mxu0 0.0
    %586 = vmatprep.subr.mxu0 0.0
    %587 = vmatpush1.msra.mxu0 0.0
    %588 = vmatprep.subr.mxu0 0.0
    %589 = vmatpush1.msra.mxu0 0.0
    %590 = vmatprep.subr.mxu0 0.0
    %591 = vmatpush1.msra.mxu0 0.0
    %592 = vmatprep.subr.mxu0 0.0
    %593 = vmatpush1.msra.mxu0 0.0
    %594 = vmatprep.subr.mxu0 0.0
    %595 = vmatpush1.msra.mxu0 0.0
    %596 = vmatprep.subr.mxu0 0.0
    %597 = vmatpush1.msra.mxu0 0.0
    %598 = vmatprep.subr.mxu0 0.0
    %599 = vmatpush1.msra.mxu0 0.0
    %600 = vmatprep.subr.mxu0 0.0
    %601 = vmatpush1.msra.mxu0 0.0
    %602 = vmatprep.subr.mxu0 0.0
    %603 = vmatpush1.msra.mxu0 0.0
    %604 = vmatprep.subr.mxu0 0.0
    %605 = vmatpush1.msra.mxu0 0.0
    %606 = vmatprep.subr.mxu0 0.0
    %607 = vmatpush1.msra.mxu0 0.0
    %608 = vmatprep.subr.mxu0 0.0
    %609 = vmatpush1.msra.mxu0 0.0
    %610 = vmatprep.subr.mxu0 0.0
    %611 = vmatpush1.msra.mxu0 0.0
    %612 = vmatprep.subr.mxu0 0.0
    %613 = vmatpush1.msra.mxu0 0.0
    %614 = vmatprep.subr.mxu0 0.0
    %615 = vmatpush1.msra.mxu0 0.0
    %616 = vmatprep.subr.mxu0 0.0
    %617 = vmatpush1.msra.mxu0 0.0
    %618 = vmatprep.mubr.f32.mxu0 0.0
    %619 = vmatmul.mubr.f32.gmra.mrb[0].mxu0 %v552
    %v620 = vpop.f32.mrb[0].mxu0
    %v621 = vadd.f32 0.0, %v620
    %v622 = vpop.f32.mrb[0].mxu0
    %623 = vdwg.mxu0
    %v624 = vpack.c.bf16 %v621, %v621
    %v625 = vld [vmem:[%s7] sm:$0xf]
    %v626 = vld [vmem:[%s7 + $0x4] sm:$0xf]
    %v627 = vld [vmem:[%s7 + $0x8] sm:$0xf]
    %v628 = vld [vmem:[%s7 + $0xc] sm:$0xf]
    %v633 = vunpack.c.l.b16 %v625
    %v634 = vunpack.c.l.b16 %v626
    %v635 = vunpack.c.l.b16 %v627
    %v636 = vunpack.c.l.b16 %v628
    %v637 = vpack.c.b16 %v634, %v633
    %v638 = vpack.c.b16 %v636, %v635
    %v642 = vsel %vm92, %v624, 0
    %644 = vmatprep.subr.bf16.mxu0 0
    %645 = vmatpush1.bf16.msra.mxu0 %v637
    %646 = vmatprep.subr.bf16.mxu0 0
    %647 = vmatpush1.bf16.msra.mxu0 %v638
    %648 = vmatprep.subr.bf16.mxu0 0
    %649 = vmatpush1.bf16.msra.mxu0 0
    %650 = vmatprep.subr.bf16.mxu0 0
    %651 = vmatpush1.bf16.msra.mxu0 0
    %652 = vmatprep.subr.bf16.mxu0 0
    %653 = vmatpush1.bf16.msra.mxu0 0
    %654 = vmatprep.subr.bf16.mxu0 0
    %655 = vmatpush1.bf16.msra.mxu0 0
    %656 = vmatprep.subr.bf16.mxu0 0
    %657 = vmatpush1.bf16.msra.mxu0 0
    %658 = vmatprep.subr.bf16.mxu0 0
    %659 = vmatpush1.bf16.msra.mxu0 0
    %660 = vmatprep.subr.bf16.mxu0 0
    %661 = vmatpush1.bf16.msra.mxu0 0
    %662 = vmatprep.subr.bf16.mxu0 0
    %663 = vmatpush1.bf16.msra.mxu0 0
    %664 = vmatprep.subr.bf16.mxu0 0
    %665 = vmatpush1.bf16.msra.mxu0 0
    %666 = vmatprep.subr.bf16.mxu0 0
    %667 = vmatpush1.bf16.msra.mxu0 0
    %668 = vmatprep.subr.bf16.mxu0 0
    %669 = vmatpush1.bf16.msra.mxu0 0
    %670 = vmatprep.subr.bf16.mxu0 0
    %671 = vmatpush1.bf16.msra.mxu0 0
    %672 = vmatprep.subr.bf16.mxu0 0
    %673 = vmatpush1.bf16.msra.mxu0 0
    %674 = vmatprep.subr.bf16.mxu0 0
    %675 = vmatpush1.bf16.msra.mxu0 0
    %676 = vmatprep.mubr.bf16.mxu0 0
    %677 = vmatmul.mubr.bf16.gmra.mrb[0].mxu0 %v642
    %v678 = vpop.f32.mrb[0].mxu0
    %v679 = vadd.f32 0.0, %v678
    %v680 = vpop.f32.mrb[0].mxu0
    %v681 = vpop.f32.mrb[0].mxu0
    %v682 = vpop.f32.mrb[0].mxu0
    %683 = vdwg.mxu0
    %v684 = vadd.f32 %v392, %v679
    %v685 = vmul.f32 %v684, %v684
    %v686 = vsel %vm66, %v685, 0.0
    %687 = vadd.xlane.f32.xlu0 %v686
    %v688 = vpop.xlane.xlu0 %687
    %v689 = vmul.f32 %v688, %v70
    %v690 = vadd.f32 %v689, 1e-06
    %v691 = vrsqrt.pop %v690
    %v692 = vmul.f32 %v684, %v691
    %v693 = vpack.c.bf16 %v692, %v692
    %v694 = vld [vmem:[%s8] sm:$0xf]
    %v695 = vld [vmem:[%s8 + $0x4] sm:$0xf]
    %v696 = vld [vmem:[%s8 + $0x8] sm:$0xf]
    %v697 = vld [vmem:[%s8 + $0xc] sm:$0xf]
    %v702 = vunpack.c.l.b16 %v694
    %v703 = vunpack.c.l.b16 %v695
    %v704 = vunpack.c.l.b16 %v696
    %v705 = vunpack.c.l.b16 %v697
    %v706 = vpack.c.b16 %v703, %v702
    %v707 = vpack.c.b16 %v705, %v704
    %v711 = vsel %vm92, %v693, 0
    %713 = vmatprep.subr.bf16.mxu0 0
    %714 = vmatpush1.bf16.msra.mxu0 %v706
    %715 = vmatprep.subr.bf16.mxu0 0
    %716 = vmatpush1.bf16.msra.mxu0 %v707
    %717 = vmatprep.subr.bf16.mxu0 0
    %718 = vmatpush1.bf16.msra.mxu0 0
    %719 = vmatprep.subr.bf16.mxu0 0
    %720 = vmatpush1.bf16.msra.mxu0 0
    %721 = vmatprep.subr.bf16.mxu0 0
    %722 = vmatpush1.bf16.msra.mxu0 0
    %723 = vmatprep.subr.bf16.mxu0 0
    %724 = vmatpush1.bf16.msra.mxu0 0
    %725 = vmatprep.subr.bf16.mxu0 0
    %726 = vmatpush1.bf16.msra.mxu0 0
    %727 = vmatprep.subr.bf16.mxu0 0
    %728 = vmatpush1.bf16.msra.mxu0 0
    %729 = vmatprep.subr.bf16.mxu0 0
    %730 = vmatpush1.bf16.msra.mxu0 0
    %731 = vmatprep.subr.bf16.mxu0 0
    %732 = vmatpush1.bf16.msra.mxu0 0
    %733 = vmatprep.subr.bf16.mxu0 0
    %734 = vmatpush1.bf16.msra.mxu0 0
    %735 = vmatprep.subr.bf16.mxu0 0
    %736 = vmatpush1.bf16.msra.mxu0 0
    %737 = vmatprep.subr.bf16.mxu0 0
    %738 = vmatpush1.bf16.msra.mxu0 0
    %739 = vmatprep.subr.bf16.mxu0 0
    %740 = vmatpush1.bf16.msra.mxu0 0
    %741 = vmatprep.subr.bf16.mxu0 0
    %742 = vmatpush1.bf16.msra.mxu0 0
    %743 = vmatprep.subr.bf16.mxu0 0
    %744 = vmatpush1.bf16.msra.mxu0 0
    %745 = vmatprep.mubr.bf16.mxu0 0
    %746 = vmatmul.mubr.bf16.gmra.mrb[0].mxu0 %v711
    %v747 = vpop.f32.mrb[0].mxu0
    %v748 = vadd.f32 0.0, %v747
    %v749 = vpop.f32.mrb[0].mxu0
    %v750 = vpop.f32.mrb[0].mxu0
    %v751 = vpop.f32.mrb[0].mxu0
    %752 = vdwg.mxu0
    %v753 = vmax.f32 %v748, 0.0
    %v754 = vpack.c.bf16 %v753, %v753
    %v755 = vld [vmem:[%s9] sm:$0xf]
    %v756 = vld [vmem:[%s9 + $0x4] sm:$0xf]
    %v757 = vld [vmem:[%s9 + $0x8] sm:$0xf]
    %v758 = vld [vmem:[%s9 + $0xc] sm:$0xf]
    %v759 = vld [vmem:[%s9 + $0x10] sm:$0xf]
    %v760 = vld [vmem:[%s9 + $0x14] sm:$0xf]
    %v761 = vld [vmem:[%s9 + $0x18] sm:$0xf]
    %v762 = vld [vmem:[%s9 + $0x1c] sm:$0xf]
    %v763 = vld [vmem:[%s9 + $0x20] sm:$0xf]
    %v764 = vld [vmem:[%s9 + $0x24] sm:$0xf]
    %v765 = vld [vmem:[%s9 + $0x28] sm:$0xf]
    %v766 = vld [vmem:[%s9 + $0x2c] sm:$0xf]
    %v767 = vld [vmem:[%s9 + $0x30] sm:$0xf]
    %v768 = vld [vmem:[%s9 + $0x34] sm:$0xf]
    %v769 = vld [vmem:[%s9 + $0x38] sm:$0xf]
    %v770 = vld [vmem:[%s9 + $0x3c] sm:$0xf]
    %v787 = vunpack.c.l.b16 %v755
    %v788 = vunpack.c.l.b16 %v756
    %v789 = vunpack.c.l.b16 %v757
    %v790 = vunpack.c.l.b16 %v758
    %v791 = vunpack.c.l.b16 %v759
    %v792 = vunpack.c.l.b16 %v760
    %v793 = vunpack.c.l.b16 %v761
    %v794 = vunpack.c.l.b16 %v762
    %v795 = vunpack.c.l.b16 %v763
    %v796 = vunpack.c.l.b16 %v764
    %v797 = vunpack.c.l.b16 %v765
    %v798 = vunpack.c.l.b16 %v766
    %v799 = vunpack.c.l.b16 %v767
    %v800 = vunpack.c.l.b16 %v768
    %v801 = vunpack.c.l.b16 %v769
    %v802 = vunpack.c.l.b16 %v770
    %v803 = vpack.c.b16 %v788, %v787
    %v804 = vpack.c.b16 %v790, %v789
    %v805 = vpack.c.b16 %v792, %v791
    %v806 = vpack.c.b16 %v794, %v793
    %v807 = vpack.c.b16 %v796, %v795
    %v808 = vpack.c.b16 %v798, %v797
    %v809 = vpack.c.b16 %v800, %v799
    %v810 = vpack.c.b16 %v802, %v801
    %819 = vmatprep.subr.bf16.mxu0 0
    %820 = vmatpush1.bf16.msra.mxu0 %v803
    %821 = vmatprep.subr.bf16.mxu0 0
    %822 = vmatpush1.bf16.msra.mxu0 %v804
    %823 = vmatprep.subr.bf16.mxu0 0
    %824 = vmatpush1.bf16.msra.mxu0 %v805
    %825 = vmatprep.subr.bf16.mxu0 0
    %826 = vmatpush1.bf16.msra.mxu0 %v806
    %827 = vmatprep.subr.bf16.mxu0 0
    %828 = vmatpush1.bf16.msra.mxu0 %v807
    %829 = vmatprep.subr.bf16.mxu0 0
    %830 = vmatpush1.bf16.msra.mxu0 %v808
    %831 = vmatprep.subr.bf16.mxu0 0
    %832 = vmatpush1.bf16.msra.mxu0 %v809
    %833 = vmatprep.subr.bf16.mxu0 0
    %834 = vmatpush1.bf16.msra.mxu0 %v810
    %835 = vmatprep.subr.bf16.mxu0 0
    %836 = vmatpush1.bf16.msra.mxu0 0
    %837 = vmatprep.subr.bf16.mxu0 0
    %838 = vmatpush1.bf16.msra.mxu0 0
    %839 = vmatprep.subr.bf16.mxu0 0
    %840 = vmatpush1.bf16.msra.mxu0 0
    %841 = vmatprep.subr.bf16.mxu0 0
    %842 = vmatpush1.bf16.msra.mxu0 0
    %843 = vmatprep.subr.bf16.mxu0 0
    %844 = vmatpush1.bf16.msra.mxu0 0
    %845 = vmatprep.subr.bf16.mxu0 0
    %846 = vmatpush1.bf16.msra.mxu0 0
    %847 = vmatprep.subr.bf16.mxu0 0
    %848 = vmatpush1.bf16.msra.mxu0 0
    %849 = vmatprep.subr.bf16.mxu0 0
    %850 = vmatpush1.bf16.msra.mxu0 0
    %851 = vmatprep.mubr.bf16.mxu0 0
    %852 = vmatmul.mubr.bf16.gmra.mrb[0].mxu0 %v754
    %v853 = vpop.f32.mrb[0].mxu0
    %v854 = vadd.f32 0.0, %v853
    %v855 = vpop.f32.mrb[0].mxu0
    %v856 = vpop.f32.mrb[0].mxu0
    %v857 = vpop.f32.mrb[0].mxu0
    %858 = vdwg.mxu0
    %v859 = vadd.f32 %v684, %v854
    %v860 = vmul.f32 %v859, %v859
    %v861 = vsel %vm66, %v860, 0.0
    %862 = vadd.xlane.f32.xlu0 %v861
    %v863 = vpop.xlane.xlu0 %862
    %v864 = vmul.f32 %v863, %v70
    %v865 = vadd.f32 %v864, 1e-06
    %v866 = vrsqrt.pop %v865
    %v867 = vmul.f32 %v859, %v866
    %v868 = vpack.c.bf16 %v867, %v867
    %v869 = vld [vmem:[%s10] sm:$0xf]
    %v870 = vld [vmem:[%s10 + $0x4] sm:$0xf]
    %v871 = vld [vmem:[%s10 + $0x8] sm:$0xf]
    %v872 = vld [vmem:[%s10 + $0xc] sm:$0xf]
    %v877 = vunpack.c.l.b16 %v869
    %v878 = vunpack.c.l.b16 %v870
    %v879 = vunpack.c.l.b16 %v871
    %v880 = vunpack.c.l.b16 %v872
    %v881 = vpack.c.b16 %v878, %v877
    %v882 = vpack.c.b16 %v880, %v879
    %v886 = vsel %vm92, %v868, 0
    %888 = vmatprep.subr.bf16.mxu0 0
    %889 = vmatpush1.bf16.msra.mxu0 %v881
    %890 = vmatprep.subr.bf16.mxu0 0
    %891 = vmatpush1.bf16.msra.mxu0 %v882
    %892 = vmatprep.subr.bf16.mxu0 0
    %893 = vmatpush1.bf16.msra.mxu0 0
    %894 = vmatprep.subr.bf16.mxu0 0
    %895 = vmatpush1.bf16.msra.mxu0 0
    %896 = vmatprep.subr.bf16.mxu0 0
    %897 = vmatpush1.bf16.msra.mxu0 0
    %898 = vmatprep.subr.bf16.mxu0 0
    %899 = vmatpush1.bf16.msra.mxu0 0
    %900 = vmatprep.subr.bf16.mxu0 0
    %901 = vmatpush1.bf16.msra.mxu0 0
    %902 = vmatprep.subr.bf16.mxu0 0
    %903 = vmatpush1.bf16.msra.mxu0 0
    %904 = vmatprep.subr.bf16.mxu0 0
    %905 = vmatpush1.bf16.msra.mxu0 0
    %906 = vmatprep.subr.bf16.mxu0 0
    %907 = vmatpush1.bf16.msra.mxu0 0
    %908 = vmatprep.subr.bf16.mxu0 0
    %909 = vmatpush1.bf16.msra.mxu0 0
    %910 = vmatprep.subr.bf16.mxu0 0
    %911 = vmatpush1.bf16.msra.mxu0 0
    %912 = vmatprep.subr.bf16.mxu0 0
    %913 = vmatpush1.bf16.msra.mxu0 0
    %914 = vmatprep.subr.bf16.mxu0 0
    %915 = vmatpush1.bf16.msra.mxu0 0
    %916 = vmatprep.subr.bf16.mxu0 0
    %917 = vmatpush1.bf16.msra.mxu0 0
    %918 = vmatprep.subr.bf16.mxu0 0
    %919 = vmatpush1.bf16.msra.mxu0 0
    %920 = vmatprep.mubr.bf16.mxu0 0
    %921 = vmatmul.mubr.bf16.gmra.mrb[0].mxu0 %v886
    %v922 = vpop.f32.mrb[0].mxu0
    %v923 = vadd.f32 0.0, %v922
    %v924 = vpop.f32.mrb[0].mxu0
    %v925 = vpop.f32.mrb[0].mxu0
    %v926 = vpop.f32.mrb[0].mxu0
    %927 = vdwg.mxu0
    %928 = vst [vmem:[%s13] sm:$0x1] %v923
    // Predicated region
    $region58: #{body.10} parent=1 // pred_check
      _
    $region59: #{body.10} parent=1 // pred_check_branch
      %930 = sbr.rel (0) target = $region61
    $region60: #{body.10} parent=1 // pred_region
      _
    $region61: #{body.10} parent=1 // pred_fallthru
      _
    // Predicated region
    $region62: #{body.10} parent=1 // pred_check
      _
    $region63: #{body.10} parent=1 // pred_check_branch
      %932 = sbr.rel (0) target = $region65
    $region64: #{body.10} parent=1 // pred_region
      _
    $region65: #{body.10} parent=1 // pred_fallthru
      _
    // Predicated region
    $region66: #{body.10} parent=1 // pred_check
      _
    $region67: #{body.10} parent=1 // pred_check_branch
      %934 = sbr.rel (0) target = $region69
    $region68: #{body.10} parent=1 // pred_region
      _
    $region69: #{body.10} parent=1 // pred_fallthru
      _
    // Predicated region
    $region70: #{body.10} parent=1 // pred_check
      _
    $region71: #{body.10} parent=1 // pred_check_branch
      %936 = sbr.rel (0) target = $region73
    $region72: #{body.10} parent=1 // pred_region
      _
    $region73: #{body.10} parent=1 // pred_fallthru
      _
    // Predicated region
    $region74: #{body.10} parent=1 // pred_check
      _
    $region75: #{body.10} parent=1 // pred_check_branch
      %938 = sbr.rel (0) target = $region77
    $region76: #{body.10} parent=1 // pred_region
      _
    $region77: #{body.10} parent=1 // pred_fallthru
      _
    // Predicated region
    $region78: #{body.10} parent=1 // pred_check
      _
    $region79: #{body.10} parent=1 // pred_check_branch
      %940 = sbr.rel (0) target = $region81
    $region80: #{body.10} parent=1 // pred_region
      _
    $region81: #{body.10} parent=1 // pred_fallthru
      _
    %941 = vsyncpa [#allocation3], 1

</llo_original>
